<compile_context>
chip_gen: v5e
topology: v5e:2x2
jax: 0.10.0
libtpu: 0.0.40
codegen_flags: <defaults>
</compile_context>

<pallas_src>
import functools
import numpy as np
import jax
import jax.numpy as jnp
from jax.experimental import pallas as pl
from jax.experimental.pallas import tpu as pltpu

BN_EPS = 1e-5


def _derive_vmem_limit():
    """Scoped-VMEM limit derived from the device, leaving ~25% headroom."""
    try:
        cap = getattr(pltpu.get_tpu_info(), "vmem_capacity_bytes", None)
        if cap:
            return int(cap) * 3 // 4          # ~96 MiB on v5e/v6e, ~48 MiB on v7x
    except Exception:
        pass
    return 48 * 1024 * 1024                   # safe fallback (also fine under interpret mode)


_VMEM_LIMIT = _derive_vmem_limit()


# ----------------------------- Pallas kernels ---------------------------------------------------

def _conv3x3_kernel(*refs, BH, H, W, relu, pool, logsoftmax, fuse_diff):
    """3x3 'same' conv on a row-block, with the zero halo built in VMEM, 9 (or 18) accumulating
    MXU matmuls, and a fused f32 epilogue: BN scale/bias, optional ReLU, optional 2x2 max-pool,
    optional channel LogSoftmax (final layer).

    refs (inputs, outputs, scratch):
      non-fused : x_ref (H,W,Cin), w_ref (9*Cin,Cout), s_ref (1,Cout), b_ref (1,Cout),
                  o_ref (BH,W,Cout), [p_ref (BH/2,W/2,Cout)], halo (BH+2,W+2,Cin)
      fuse_diff : up_ref/a_ref/b_ref (H,W,C), w_ref (18*C,Cout), s_ref, b_ref,
                  o_ref, up_halo (BH+2,W+2,C), df_halo (BH+2,W+2,C)
    """
    if fuse_diff:
        up_ref, a_ref, b_ref, w_ref, s_ref, bias_ref = refs[0:6]
        o_ref = refs[6]
        p_ref = refs[7] if pool else None
        halos = refs[7 + int(pool):]
    else:
        x_ref, w_ref, s_ref, bias_ref = refs[0:4]
        o_ref = refs[4]
        p_ref = refs[5] if pool else None
        halos = refs[5 + int(pool):]

    r0 = pl.program_id(1) * BH                       # first output row of this row-block

    def fill_halo(halo, load):
        """Zero-padded (BH+2, W+2, C) halo of the row-block.  Only contiguous pl.ds indexing."""
        halo[...] = jnp.zeros(halo.shape, halo.dtype)
        halo[pl.ds(1, BH), pl.ds(1, W), :] = load(r0, BH)

        @pl.when(r0 > 0)
        def _top():
            halo[pl.ds(0, 1), pl.ds(1, W), :] = load(r0 - 1, 1)

        @pl.when(r0 + BH < H)
        def _bot():
            halo[pl.ds(BH + 1, 1), pl.ds(1, W), :] = load(r0 + BH, 1)

    if fuse_diff:
        up_halo, df_halo = halos
        fill_halo(up_halo, lambda s, n: up_ref[pl.ds(s, n), :, :])
        # |a - b| computed ONCE per row-block (not per tap), stored in its own halo scratch.
        fill_halo(df_halo, lambda s, n: jnp.abs(
            a_ref[pl.ds(s, n), :, :].astype(jnp.float32)
            - b_ref[pl.ds(s, n), :, :].astype(jnp.float32)).astype(df_halo.dtype))
        srcs = [up_halo, df_halo]
    else:
        (x_halo,) = halos
        fill_halo(x_halo, lambda s, n: x_ref[pl.ds(s, n), :, :])
        srcs = [x_halo]

    n_taps = 9 * len(srcs)
    cin = w_ref.shape[0] // n_taps
    cout = o_ref.shape[-1]

    # 9 (or 18) accumulating MXU matmuls, M = BH*W, K = Cin, f32 accumulation.
    acc = jnp.zeros((BH * W, cout), jnp.float32)
    k = 0
    for halo in srcs:
        for kh in range(3):
            for kw in range(3):
                tap = halo[pl.ds(kh, BH), pl.ds(kw, W), :].reshape(BH * W, cin)
                wk = w_ref[pl.ds(k * cin, cin), :]
                acc = acc + jnp.dot(tap, wk, preferred_element_type=jnp.float32)
                k += 1

    # f32 epilogue: folded BN, optional ReLU / LogSoftmax.
    y = acc * s_ref[...] + bias_ref[...]
    if relu:
        y = jnp.maximum(y, 0.0)
    if logsoftmax:
        m = jnp.max(y, axis=-1, keepdims=True)
        y = y - m
        y = y - jnp.log(jnp.sum(jnp.exp(y), axis=-1, keepdims=True))

    y3 = y.reshape(BH, W, cout)
    o_ref[...] = y3.astype(o_ref.dtype)

    if pool:
        # Fused 2x2/stride-2 max-pool on the live f32 value (no strided ref re-reads).
        rm = jnp.max(y3.reshape(BH // 2, 2, W, cout), axis=1)          # row-pair max
        pm = jnp.max(rm.reshape(BH // 2, W // 2, 2, cout), axis=2)     # col-pair max
        p_ref[...] = pm.astype(p_ref.dtype)


def _upconv2x_kernel(x_ref, we_ref, wo_ref, b_ref, o_ref, ext_ref, *, h, w):
    """ConvTranspose2d(k=3, stride=2, padding=1, output_padding=1) via sub-pixel decomposition.

    x_ref (h, w, Cin); ext_ref scratch (h+1, w+1, Cin) (bottom/right zero extension);
    we_ref (2*Cin, 2*Cout) / wo_ref (4*Cin, 2*Cout): per-tap weights for the even / odd output
    rows, with the two column phases concatenated on the output (lane) axis;
    o_ref (h, 2, w, 2*Cout): phase-major output -> wrapper reshape gives (2h, 2w, Cout).
    """
    cin = x_ref.shape[-1]
    cout2 = o_ref.shape[-1]

    ext_ref[...] = jnp.zeros(ext_ref.shape, ext_ref.dtype)
    ext_ref[pl.ds(0, h), pl.ds(0, w), :] = x_ref[...]

    def tap(di, dj):
        return ext_ref[pl.ds(di, h), pl.ds(dj, w), :].reshape(h * w, cin)

    t00, t01, t10, t11 = tap(0, 0), tap(0, 1), tap(1, 0), tap(1, 1)
    bias = b_ref[...]

    even = (jnp.dot(t00, we_ref[pl.ds(0, cin), :], preferred_element_type=jnp.float32)
            + jnp.dot(t01, we_ref[pl.ds(cin, cin), :], preferred_element_type=jnp.float32)
            + bias)
    odd = (jnp.dot(t00, wo_ref[pl.ds(0, cin), :], preferred_element_type=jnp.float32)
           + jnp.dot(t01, wo_ref[pl.ds(cin, cin), :], preferred_element_type=jnp.float32)
           + jnp.dot(t10, wo_ref[pl.ds(2 * cin, cin), :], preferred_element_type=jnp.float32)
           + jnp.dot(t11, wo_ref[pl.ds(3 * cin, cin), :], preferred_element_type=jnp.float32)
           + bias)

    o_ref[:, pl.ds(0, 1), :, :] = even.reshape(h, 1, w, cout2).astype(o_ref.dtype)
    o_ref[:, pl.ds(1, 1), :, :] = odd.reshape(h, 1, w, cout2).astype(o_ref.dtype)


# ----------------------------- pallas_call wrappers ---------------------------------------------

def _pick_bh(H, W, pool):
    """Row-block: largest divisor of H (even when pooling) with M = BH*W <= 512."""
    step = 2 if pool else 1
    cands = [bh for bh in range(step, H + 1, step) if H % bh == 0]
    if not cands:
        cands = [H]
    ok = [bh for bh in cands if bh * W <= 512]
    return ok[-1] if ok else cands[0]


def _conv_call(inputs, w_mat, scale2, bias2, *, H, W, Cout, relu, pool, logsoftmax,
               fuse_diff, out_dtype):
    """Shared pallas_call builder for the 3x3 conv kernel."""
    Nb = inputs[0].shape[0]
    cin_tap = w_mat.shape[0] // (18 if fuse_diff else 9)
    BH = _pick_bh(H, W, pool)
    kernel = functools.partial(_conv3x3_kernel, BH=BH, H=H, W=W, relu=relu, pool=pool,
                               logsoftmax=logsoftmax, fuse_diff=fuse_diff)

    in_specs = [pl.BlockSpec((None, H, W, t.shape[-1]), lambda n, r: (n, 0, 0, 0))
                for t in inputs]
    in_specs += [
        pl.BlockSpec((w_mat.shape[0], Cout), lambda n, r: (0, 0)),
        pl.BlockSpec((1, Cout), lambda n, r: (0, 0)),
        pl.BlockSpec((1, Cout), lambda n, r: (0, 0)),
    ]
    out_shape = [jax.ShapeDtypeStruct((Nb, H, W, Cout), out_dtype)]
    out_specs = [pl.BlockSpec((None, BH, W, Cout), lambda n, r: (n, r, 0, 0))]
    if pool:
        out_shape.append(jax.ShapeDtypeStruct((Nb, H // 2, W // 2, Cout), out_dtype))
        out_specs.append(
            pl.BlockSpec((None, BH // 2, W // 2, Cout), lambda n, r: (n, r, 0, 0)))

    scratch = [pltpu.VMEM((BH + 2, W + 2, cin_tap), jnp.bfloat16)]
    if fuse_diff:
        scratch.append(pltpu.VMEM((BH + 2, W + 2, cin_tap), jnp.bfloat16))

    return pl.pallas_call(
        kernel,
        grid=(Nb, H // BH),
        in_specs=in_specs,
        out_specs=tuple(out_specs) if pool else out_specs[0],
        out_shape=tuple(out_shape) if pool else out_shape[0],
        scratch_shapes=scratch,
        compiler_params=pltpu.CompilerParams(
            dimension_semantics=("parallel", "parallel"),     # batch x row-block (megacore)
            vmem_limit_bytes=_VMEM_LIMIT),
    )(*inputs, w_mat, scale2, bias2)


def conv3x3_bn(x, w, scale, bias, *, relu=True, pool=False, logsoftmax=False,
               out_dtype=jnp.bfloat16):
    """3x3 'same' conv + folded BN + optional ReLU (+ optional fused 2x2 max-pool / LogSoftmax).

    x: (N,H,W,Cin); w: (3,3,Cin,Cout) f32; scale/bias: (Cout,) f32.
    Returns conv output, or (conv, pooled) if pool=True.
    """
    N, H, W, Cin = x.shape
    Cout = w.shape[-1]
    w_mat = w.reshape(9 * Cin, Cout).astype(jnp.bfloat16)      # rows ordered (kh, kw, ci)
    s2 = scale.reshape(1, Cout).astype(jnp.float32)
    b2 = bias.reshape(1, Cout).astype(jnp.float32)
    return _conv_call([x.astype(jnp.bfloat16)], w_mat, s2, b2, H=H, W=W, Cout=Cout,
                      relu=relu, pool=pool, logsoftmax=logsoftmax,
                      fuse_diff=False, out_dtype=out_dtype)


def conv3x3_skip_bn(up, a, b, w, scale, bias, *, relu=True):
    """conv3x3(concat([up, |a-b|], channel)) + folded BN + ReLU, with the concat / abs-diff fused
    into the conv (weight split: w[:, :, :C] for `up`, w[:, :, C:] for |a-b|)."""
    N, H, W, C = up.shape
    Cout = w.shape[-1]
    w_up = w[:, :, :C, :].reshape(9 * C, Cout)
    w_df = w[:, :, C:, :].reshape(9 * C, Cout)
    w_mat = jnp.concatenate([w_up, w_df], axis=0).astype(jnp.bfloat16)     # (18*C, Cout)
    s2 = scale.reshape(1, Cout).astype(jnp.float32)
    b2 = bias.reshape(1, Cout).astype(jnp.float32)
    inputs = [up.astype(jnp.bfloat16), a.astype(jnp.bfloat16), b.astype(jnp.bfloat16)]
    return _conv_call(inputs, w_mat, s2, b2, H=H, W=W, Cout=Cout, relu=relu, pool=False,
                      logsoftmax=False, fuse_diff=True, out_dtype=jnp.bfloat16)


def upconv2x(x, w9, bias):
    """ConvTranspose2d(k=3, stride=2, padding=1, output_padding=1).

    x: (N,h,w,Cin); w9: (3,3,Cin,Cout) in transpose-conv orientation (w9[kh,kw] = W_pt[:,:,kh,kw]);
    bias: (Cout,).  Sub-pixel decomposition derived from y = 2i - 1 + kh, x = 2j - 1 + kw:
      out[2r  , 2c  ] = T00.W[1,1]
      out[2r  , 2c+1] = T01.W[1,0] + T00.W[1,2]
      out[2r+1, 2c  ] = T10.W[0,1] + T00.W[2,1]
      out[2r+1, 2c+1] = T11.W[0,0] + T10.W[0,2] + T01.W[2,0] + T00.W[2,2]
    with T00=X[r,c], T01=X[r,c+1], T10=X[r+1,c], T11=X[r+1,c+1] (zero outside)."""
    N, h, w_, Cin = x.shape
    Cout = w9.shape[-1]
    Z = jnp.zeros((Cin, Cout), w9.dtype)
    # Column phases concatenated on the output (lane) axis -> lane-dense 2*Cout stores.
    We = jnp.concatenate([
        jnp.concatenate([w9[1, 1], w9[1, 2]], axis=1),   # T00
        jnp.concatenate([Z,        w9[1, 0]], axis=1),   # T01
    ], axis=0).astype(jnp.bfloat16)                       # (2*Cin, 2*Cout)
    Wo = jnp.concatenate([
        jnp.concatenate([w9[2, 1], w9[2, 2]], axis=1),   # T00
        jnp.concatenate([Z,        w9[2, 0]], axis=1),   # T01
        jnp.concatenate([w9[0, 1], w9[0, 2]], axis=1),   # T10
        jnp.concatenate([Z,        w9[0, 0]], axis=1),   # T11
    ], axis=0).astype(jnp.bfloat16)                       # (4*Cin, 2*Cout)
    b2 = jnp.concatenate([bias, bias]).reshape(1, 2 * Cout).astype(jnp.float32)

    y = pl.pallas_call(
        functools.partial(_upconv2x_kernel, h=h, w=w_),
        grid=(N,),
        in_specs=[
            pl.BlockSpec((None, h, w_, Cin), lambda n: (n, 0, 0, 0)),
            pl.BlockSpec((2 * Cin, 2 * Cout), lambda n: (0, 0)),
            pl.BlockSpec((4 * Cin, 2 * Cout), lambda n: (0, 0)),
            pl.BlockSpec((1, 2 * Cout), lambda n: (0, 0)),
        ],
        out_specs=pl.BlockSpec((None, h, 2, w_, 2 * Cout), lambda n: (n, 0, 0, 0, 0)),
        out_shape=jax.ShapeDtypeStruct((N, h, 2, w_, 2 * Cout), jnp.bfloat16),
        scratch_shapes=[pltpu.VMEM((h + 1, w_ + 1, Cin), jnp.bfloat16)],
        compiler_params=pltpu.CompilerParams(
            dimension_semantics=("parallel",), vmem_limit_bytes=_VMEM_LIMIT),
    )(x.astype(jnp.bfloat16), We, Wo, b2)
    # Pure row-major reshape interleaves the phases (no transpose pass).
    return y.reshape(N, 2 * h, 2 * w_, Cout)


# ----------------------------- parameters -------------------------------------------------------

def _fold_bn(conv_bias, gamma, beta, mean, var):
    scale = gamma / jnp.sqrt(var + BN_EPS)
    bias = beta + scale * (conv_bias - mean)
    return scale, bias


def init_params(key, input_nbr, label_nbr):
    params = {}
    keys = iter(jax.random.split(key, 256))

    def _bn_stats(cout):
        gamma = 1.0 + 0.1 * jax.random.normal(next(keys), (cout,), jnp.float32)
        beta = 0.05 * jax.random.normal(next(keys), (cout,), jnp.float32)
        mean = 0.05 * jax.random.normal(next(keys), (cout,), jnp.float32)
        var = 0.5 + jax.random.uniform(next(keys), (cout,), jnp.float32)
        return gamma, beta, mean, var

    def add_conv(name, cin, cout, bn=True):
        # nn.Conv2d weight (Cout, Cin, 3, 3) -> correlation layout (kh, kw, Cin, Cout)
        w = jax.random.normal(next(keys), (cout, cin, 3, 3), jnp.float32) / np.sqrt(9.0 * cin)
        b = 0.05 * jax.random.normal(next(keys), (cout,), jnp.float32)
        wl = jnp.transpose(w, (2, 3, 1, 0))
        if bn:
            scale, bias = _fold_bn(b, *_bn_stats(cout))
        else:
            scale, bias = jnp.ones((cout,), jnp.float32), b
        params[name] = (wl, scale, bias)

    def add_tconv(name, cin, cout, bn=True):
        # nn.ConvTranspose2d(stride=1, padding=1) == correlation with the spatially flipped,
        # in/out-swapped kernel -> (kh, kw, Cin, Cout)
        wt = jax.random.normal(next(keys), (cin, cout, 3, 3), jnp.float32) / np.sqrt(9.0 * cin)
        b = 0.05 * jax.random.normal(next(keys), (cout,), jnp.float32)
        wl = jnp.transpose(jnp.flip(wt, axis=(2, 3)), (2, 3, 0, 1))
        if bn:
            scale, bias = _fold_bn(b, *_bn_stats(cout))
        else:
            scale, bias = jnp.ones((cout,), jnp.float32), b
        params[name] = (wl, scale, bias)

    def add_upconv(name, cin, cout):
        # nn.ConvTranspose2d(stride=2) weight kept in transpose-conv orientation (kh,kw,Cin,Cout)
        wt = jax.random.normal(next(keys), (cin, cout, 3, 3), jnp.float32) / np.sqrt(9.0 * cin)
        b = 0.05 * jax.random.normal(next(keys), (cout,), jnp.float32)
        params[name] = (jnp.transpose(wt, (2, 3, 0, 1)), b)

    add_conv('conv11', input_nbr, 16); add_conv('conv12', 16, 16)
    add_conv('conv21', 16, 32);        add_conv('conv22', 32, 32)
    add_conv('conv31', 32, 64);        add_conv('conv32', 64, 64);   add_conv('conv33', 64, 64)
    add_conv('conv41', 64, 128);       add_conv('conv42', 128, 128); add_conv('conv43', 128, 128)
    add_upconv('upconv4', 128, 128)
    add_tconv('conv43d', 256, 128); add_tconv('conv42d', 128, 128); add_tconv('conv41d', 128, 64)
    add_upconv('upconv3', 64, 64)
    add_tconv('conv33d', 128, 64);  add_tconv('conv32d', 64, 64);   add_tconv('conv31d', 64, 32)
    add_upconv('upconv2', 32, 32)
    add_tconv('conv22d', 64, 32);   add_tconv('conv21d', 32, 16)
    add_upconv('upconv1', 16, 16)
    add_tconv('conv12d', 32, 16)
    add_tconv('conv11d', 16, label_nbr, bn=False)
    return params


# ----------------------------- forward pass -----------------------------------------------------

def siam_unet_forward(params, x1_nchw, x2_nchw):
    N = x1_nchw.shape[0]
    x1 = jnp.transpose(x1_nchw, (0, 2, 3, 1)).astype(jnp.bfloat16)
    x2 = jnp.transpose(x2_nchw, (0, 2, 3, 1)).astype(jnp.bfloat16)

    def cbr(x, name, relu=True, pool=False):
        w, s, b = params[name]                       # Dropout2d == identity (eval)
        return conv3x3_bn(x, w, s, b, relu=relu, pool=pool)

    def cbr_skip(up_, a, b, name):                   # conv(cat([up, |a-b|])) + BN + ReLU, fused
        w, s, bb = params[name]
        return conv3x3_skip_bn(up_, a, b, w, s, bb, relu=True)

    def up(x, name):                                 # ConvTranspose2d stride=2 (no BN)
        w9, b = params[name]
        return upconv2x(x, w9, b)

    # Siamese encoder: identical weights on both images -> run both as one batch of 2N.
    x = jnp.concatenate([x1, x2], axis=0)
    x = cbr(x, 'conv11')
    x12, x = cbr(x, 'conv12', pool=True)             # fused 2x2 max-pool
    x = cbr(x, 'conv21')
    x22, x = cbr(x, 'conv22', pool=True)
    x = cbr(x, 'conv31'); x = cbr(x, 'conv32')
    x33, x = cbr(x, 'conv33', pool=True)
    x = cbr(x, 'conv41'); x = cbr(x, 'conv42')
    x43, x4p = cbr(x, 'conv43', pool=True)

    x12_1, x12_2 = x12[:N], x12[N:]
    x22_1, x22_2 = x22[:N], x22[N:]
    x33_1, x33_2 = x33[:N], x33[N:]
    x43_1, x43_2 = x43[:N], x43[N:]
    x4p_2 = x4p[N:]   # PyTorch forward overwrites x4p: only the x2-branch value feeds the decoder.

    # Decoder (ReplicationPad2d amounts are exactly zero for spatial dims divisible by 16).
    d = up(x4p_2, 'upconv4')
    d = cbr_skip(d, x43_1, x43_2, 'conv43d')
    d = cbr(d, 'conv42d'); d = cbr(d, 'conv41d')
    d = up(d, 'upconv3')
    d = cbr_skip(d, x33_1, x33_2, 'conv33d')
    d = cbr(d, 'conv32d'); d = cbr(d, 'conv31d')
    d = up(d, 'upconv2')
    d = cbr_skip(d, x22_1, x22_2, 'conv22d')
    d = cbr(d, 'conv21d')
    d = up(d, 'upconv1')
    d = cbr_skip(d, x12_1, x12_2, 'conv12d')
    # Final conv: no BN, no ReLU; nn.LogSoftmax(dim=1) fused into the f32 epilogue.
    w, s, b = params['conv11d']
    d = conv3x3_bn(d, w, s, b, relu=False, logsoftmax=True, out_dtype=jnp.float32)
    return jnp.transpose(d, (0, 3, 1, 2))            # back to NCHW


# ----------------------------- references for parity checks -------------------------------------

def _ref_conv_bn_relu(x, w, scale, bias, relu=True):
    xf = x.astype(jnp.float32)
    wf = w.astype(jnp.bfloat16).astype(jnp.float32)
    y = jax.lax.conv_general_dilated(xf, wf, window_strides=(1, 1), padding=((1, 1), (1, 1)),
                                     dimension_numbers=("NHWC", "HWIO", "NHWC"))
    y = y * scale.reshape(1, 1, 1, -1) + bias.reshape(1, 1, 1, -1)
    return jnp.maximum(y, 0.0) if relu else y


def _ref_maxpool2(x):
    N, H, W, C = x.shape
    return jnp.max(x.reshape(N, H // 2, 2, W // 2, 2, C), axis=(2, 4))


def _ref_upconv2x(x, w9, bias):
    # ConvTranspose2d(k=3,s=2,p=1,op=1) == input-dilated correlation with the flipped kernel.
    xf = x.astype(jnp.float32)
    wf = w9.astype(jnp.bfloat16).astype(jnp.float32)
    wflip = wf[::-1, ::-1, :, :]
    y = jax.lax.conv_general_dilated(xf, wflip, window_strides=(1, 1),
                                     padding=((1, 2), (1, 2)), lhs_dilation=(2, 2),
                                     dimension_numbers=("NHWC", "HWIO", "NHWC"))
    return y + bias.reshape(1, 1, 1, -1)


def _assert_close(a, b, name, tol=5e-2):
    a = np.asarray(jnp.asarray(a, jnp.float32))
    b = np.asarray(jnp.asarray(b, jnp.float32))
    err = float(np.max(np.abs(a - b) / (1.0 + np.abs(b))))
    assert err < tol, f"{name}: max scaled error {err:.4f} >= {tol}"


# ----------------------------- demo -------------------------------------------------------------

if __name__ == "__main__":
    input_nbr, label_nbr = 4, 2
    N, H, W = 2, 16, 16

    root = jax.random.PRNGKey(0)
    kp, kx1, kx2, kt1, kt2 = jax.random.split(root, 5)
    params = init_params(kp, input_nbr, label_nbr)

    # Targeted parity checks (reviewer correctness concerns: halo conv, fused pool, sub-pixel
    # upconv phase mapping) against lax references fed the same bf16-rounded operands.
    xt = jax.random.normal(kt1, (2, 8, 8, 16), jnp.float32).astype(jnp.bfloat16)
    w_c, s_c, b_c = params['conv12']
    got_c, got_p = conv3x3_bn(xt, w_c, s_c, b_c, relu=True, pool=True)
    ref_c = _ref_conv_bn_relu(xt, w_c, s_c, b_c, relu=True)
    _assert_close(got_c, ref_c, "conv3x3+bn+relu")
    _assert_close(got_p, _ref_maxpool2(ref_c), "fused 2x2 maxpool")

    xu = jax.random.normal(kt2, (2, 4, 4, 128), jnp.float32).astype(jnp.bfloat16)
    w_u, b_u = params['upconv4']
    _assert_close(upconv2x(xu, w_u, b_u), _ref_upconv2x(xu, w_u, b_u),
                  "ConvTranspose2d(k=3,s=2,p=1,op=1) sub-pixel kernel")

    # Full forward pass.
    x1 = jax.random.normal(kx1, (N, input_nbr, H, W), jnp.float32)
    x2 = jax.random.normal(kx2, (N, input_nbr, H, W), jnp.float32)
    fwd = jax.jit(siam_unet_forward)
    out = jax.block_until_ready(fwd(params, x1, x2))

    assert out.shape == (N, label_nbr, H, W), out.shape
    assert bool(jnp.all(jnp.isfinite(out)))
    # exp(log_softmax) must sum to 1 over the channel axis
    probs = jnp.exp(out.astype(jnp.float32)).sum(axis=1)
    assert bool(jnp.all(jnp.abs(probs - 1.0) < 1e-3))
    print("KERNEL_OK")
</pallas_src>

<mosaic_0001>
module attributes {stable_mosaic.version = 11 : i64} {
  func.func @_conv3x3_kernel(%arg0: i32, %arg1: i32, %arg2: memref<1x8x8x16xbf16, #tpu.memory_space<vmem>>, %arg3: memref<144x16xbf16, #tpu.memory_space<vmem>>, %arg4: memref<1x16xf32, #tpu.memory_space<vmem>>, %arg5: memref<1x16xf32, #tpu.memory_space<vmem>>, %arg6: memref<1x8x8x16xbf16, #tpu.memory_space<vmem>>, %arg7: memref<1x4x4x16xbf16, #tpu.memory_space<vmem>>, %arg8: memref<10x10x16xbf16, #tpu.memory_space<vmem>>) attributes {dimension_semantics = [#tpu.dimension_semantics<parallel>, #tpu.dimension_semantics<parallel>], iteration_bounds = array<i64: 2, 1>, scalar_prefetch = 0 : i64, scratch_operands = 1 : i64, tpu.core_type = #tpu.core_type<tc>, window_params = [{transform_indices = @transform_0, window_bounds = array<i64: 1, 8, 8, 16>}, {pipeline_mode = #tpu.pipeline_mode<synchronous>, transform_indices = @transform_1, window_bounds = array<i64: 144, 16>}, {pipeline_mode = #tpu.pipeline_mode<synchronous>, transform_indices = @transform_2, window_bounds = array<i64: 1, 16>}, {pipeline_mode = #tpu.pipeline_mode<synchronous>, transform_indices = @transform_3, window_bounds = array<i64: 1, 16>}, {transform_indices = @transform_4, window_bounds = array<i64: 1, 8, 8, 16>}, {transform_indices = @transform_5, window_bounds = array<i64: 1, 4, 4, 16>}]} {
    %c8_i32 = arith.constant 8 : i32
    %0 = arith.muli %arg1, %c8_i32 : i32
    %cst = arith.constant 0.000000e+00 : bf16
    %1 = vector.broadcast %cst : bf16 to vector<10x10x16xbf16>
    %c0 = arith.constant 0 : index
    %c0_0 = arith.constant 0 : index
    %c0_1 = arith.constant 0 : index
    %2 = vector.load %arg8[%c0, %c0_0, %c0_1] : memref<10x10x16xbf16, #tpu.memory_space<vmem>>, vector<10x10x16xbf16>
    tpu.vector_store %arg8[%c0, %c0_0, %c0_1], %1 {strides = array<i32>} : memref<10x10x16xbf16, #tpu.memory_space<vmem>>, vector<10x10x16xbf16>,
    %c0_2 = arith.constant 0 : index
    %3 = arith.index_cast %0 : i32 to index
    %c0_3 = arith.constant 0 : index
    %c0_4 = arith.constant 0 : index
    %4 = vector.load %arg2[%c0_2, %3, %c0_3, %c0_4] : memref<1x8x8x16xbf16, #tpu.memory_space<vmem>>, vector<1x8x8x16xbf16>
    %5 = vector.shape_cast %4 : vector<1x8x8x16xbf16> to vector<8x8x16xbf16>
    %c1 = arith.constant 1 : index
    %c1_5 = arith.constant 1 : index
    %c0_6 = arith.constant 0 : index
    %6 = vector.load %arg8[%c1, %c1_5, %c0_6] : memref<10x10x16xbf16, #tpu.memory_space<vmem>>, vector<8x8x16xbf16>
    tpu.vector_store %arg8[%c1, %c1_5, %c0_6], %5 {strides = array<i32>} : memref<10x10x16xbf16, #tpu.memory_space<vmem>>, vector<8x8x16xbf16>,
    %c0_i32 = arith.constant 0 : i32
    %7 = arith.cmpi sgt, %0, %c0_i32 : i32
    %8 = arith.extui %7 : i1 to i32
    %c0_i32_7 = arith.constant 0 : i32
    %9 = arith.cmpi ne, %8, %c0_i32_7 : i32
    scf.if %9 {
      %c1_i32 = arith.constant 1 : i32
      %81 = arith.subi %0, %c1_i32 : i32
      %c0_72 = arith.constant 0 : index
      %82 = arith.index_cast %81 : i32 to index
      %c0_73 = arith.constant 0 : index
      %c0_74 = arith.constant 0 : index
      %83 = vector.load %arg2[%c0_72, %82, %c0_73, %c0_74] : memref<1x8x8x16xbf16, #tpu.memory_space<vmem>>, vector<1x1x8x16xbf16>
      %84 = vector.shape_cast %83 : vector<1x1x8x16xbf16> to vector<1x8x16xbf16>
      %c0_75 = arith.constant 0 : index
      %c1_76 = arith.constant 1 : index
      %c0_77 = arith.constant 0 : index
      %85 = vector.load %arg8[%c0_75, %c1_76, %c0_77] : memref<10x10x16xbf16, #tpu.memory_space<vmem>>, vector<1x8x16xbf16>
      tpu.vector_store %arg8[%c0_75, %c1_76, %c0_77], %84 {strides = array<i32>} : memref<10x10x16xbf16, #tpu.memory_space<vmem>>, vector<1x8x16xbf16>,
    } else {
    }
    %c8_i32_8 = arith.constant 8 : i32
    %10 = arith.addi %0, %c8_i32_8 : i32
    %c8_i32_9 = arith.constant 8 : i32
    %11 = arith.cmpi slt, %10, %c8_i32_9 : i32
    %12 = arith.extui %11 : i1 to i32
    %c0_i32_10 = arith.constant 0 : i32
    %13 = arith.cmpi ne, %12, %c0_i32_10 : i32
    scf.if %13 {
      %c8_i32_72 = arith.constant 8 : i32
      %81 = arith.addi %0, %c8_i32_72 : i32
      %c0_73 = arith.constant 0 : index
      %82 = arith.index_cast %81 : i32 to index
      %c0_74 = arith.constant 0 : index
      %c0_75 = arith.constant 0 : index
      %83 = vector.load %arg2[%c0_73, %82, %c0_74, %c0_75] : memref<1x8x8x16xbf16, #tpu.memory_space<vmem>>, vector<1x1x8x16xbf16>
      %84 = vector.shape_cast %83 : vector<1x1x8x16xbf16> to vector<1x8x16xbf16>
      %c9 = arith.constant 9 : index
      %c1_76 = arith.constant 1 : index
      %c0_77 = arith.constant 0 : index
      %85 = vector.load %arg8[%c9, %c1_76, %c0_77] : memref<10x10x16xbf16, #tpu.memory_space<vmem>>, vector<1x8x16xbf16>
      tpu.vector_store %arg8[%c9, %c1_76, %c0_77], %84 {strides = array<i32>} : memref<10x10x16xbf16, #tpu.memory_space<vmem>>, vector<1x8x16xbf16>,
    } else {
    }
    %cst_11 = arith.constant 0.000000e+00 : f32
    %14 = vector.broadcast %cst_11 : f32 to vector<64x16xf32>
    %c0_12 = arith.constant 0 : index
    %c0_13 = arith.constant 0 : index
    %c0_14 = arith.constant 0 : index
    %15 = vector.load %arg8[%c0_12, %c0_13, %c0_14] : memref<10x10x16xbf16, #tpu.memory_space<vmem>>, vector<8x8x16xbf16>
    %16 = vector.shape_cast %15 : vector<8x8x16xbf16> to vector<64x16xbf16>
    %c0_15 = arith.constant 0 : index
    %c0_16 = arith.constant 0 : index
    %17 = vector.load %arg3[%c0_15, %c0_16] : memref<144x16xbf16, #tpu.memory_space<vmem>>, vector<16x16xbf16>
    %cst_17 = arith.constant dense<0.000000e+00> : vector<64x16xf32>
    %18 = tpu.matmul %16, %17, %cst_17 {dimension_numbers = #tpu.dot_dimension_numbers<[1], [0], [0], [1], [0, 0, 1, 1], [], []>} : vector<64x16xbf16>, vector<16x16xbf16>, vector<64x16xf32> -> vector<64x16xf32>
    %19 = arith.addf %14, %18 : vector<64x16xf32>
    %c0_18 = arith.constant 0 : index
    %c1_19 = arith.constant 1 : index
    %c0_20 = arith.constant 0 : index
    %20 = vector.load %arg8[%c0_18, %c1_19, %c0_20] : memref<10x10x16xbf16, #tpu.memory_space<vmem>>, vector<8x8x16xbf16>
    %21 = vector.shape_cast %20 : vector<8x8x16xbf16> to vector<64x16xbf16>
    %c16 = arith.constant 16 : index
    %c0_21 = arith.constant 0 : index
    %22 = vector.load %arg3[%c16, %c0_21] : memref<144x16xbf16, #tpu.memory_space<vmem>>, vector<16x16xbf16>
    %cst_22 = arith.constant dense<0.000000e+00> : vector<64x16xf32>
    %23 = tpu.matmul %21, %22, %cst_22 {dimension_numbers = #tpu.dot_dimension_numbers<[1], [0], [0], [1], [0, 0, 1, 1], [], []>} : vector<64x16xbf16>, vector<16x16xbf16>, vector<64x16xf32> -> vector<64x16xf32>
    %24 = arith.addf %19, %23 : vector<64x16xf32>
    %c0_23 = arith.constant 0 : index
    %c2 = arith.constant 2 : index
    %c0_24 = arith.constant 0 : index
    %25 = vector.load %arg8[%c0_23, %c2, %c0_24] : memref<10x10x16xbf16, #tpu.memory_space<vmem>>, vector<8x8x16xbf16>
    %26 = vector.shape_cast %25 : vector<8x8x16xbf16> to vector<64x16xbf16>
    %c32 = arith.constant 32 : index
    %c0_25 = arith.constant 0 : index
    %27 = vector.load %arg3[%c32, %c0_25] : memref<144x16xbf16, #tpu.memory_space<vmem>>, vector<16x16xbf16>
    %cst_26 = arith.constant dense<0.000000e+00> : vector<64x16xf32>
    %28 = tpu.matmul %26, %27, %cst_26 {dimension_numbers = #tpu.dot_dimension_numbers<[1], [0], [0], [1], [0, 0, 1, 1], [], []>} : vector<64x16xbf16>, vector<16x16xbf16>, vector<64x16xf32> -> vector<64x16xf32>
    %29 = arith.addf %24, %28 : vector<64x16xf32>
    %c1_27 = arith.constant 1 : index
    %c0_28 = arith.constant 0 : index
    %c0_29 = arith.constant 0 : index
    %30 = vector.load %arg8[%c1_27, %c0_28, %c0_29] : memref<10x10x16xbf16, #tpu.memory_space<vmem>>, vector<8x8x16xbf16>
    %31 = vector.shape_cast %30 : vector<8x8x16xbf16> to vector<64x16xbf16>
    %c48 = arith.constant 48 : index
    %c0_30 = arith.constant 0 : index
    %32 = vector.load %arg3[%c48, %c0_30] : memref<144x16xbf16, #tpu.memory_space<vmem>>, vector<16x16xbf16>
    %cst_31 = arith.constant dense<0.000000e+00> : vector<64x16xf32>
    %33 = tpu.matmul %31, %32, %cst_31 {dimension_numbers = #tpu.dot_dimension_numbers<[1], [0], [0], [1], [0, 0, 1, 1], [], []>} : vector<64x16xbf16>, vector<16x16xbf16>, vector<64x16xf32> -> vector<64x16xf32>
    %34 = arith.addf %29, %33 : vector<64x16xf32>
    %c1_32 = arith.constant 1 : index
    %c1_33 = arith.constant 1 : index
    %c0_34 = arith.constant 0 : index
    %35 = vector.load %arg8[%c1_32, %c1_33, %c0_34] : memref<10x10x16xbf16, #tpu.memory_space<vmem>>, vector<8x8x16xbf16>
    %36 = vector.shape_cast %35 : vector<8x8x16xbf16> to vector<64x16xbf16>
    %c64 = arith.constant 64 : index
    %c0_35 = arith.constant 0 : index
    %37 = vector.load %arg3[%c64, %c0_35] : memref<144x16xbf16, #tpu.memory_space<vmem>>, vector<16x16xbf16>
    %cst_36 = arith.constant dense<0.000000e+00> : vector<64x16xf32>
    %38 = tpu.matmul %36, %37, %cst_36 {dimension_numbers = #tpu.dot_dimension_numbers<[1], [0], [0], [1], [0, 0, 1, 1], [], []>} : vector<64x16xbf16>, vector<16x16xbf16>, vector<64x16xf32> -> vector<64x16xf32>
    %39 = arith.addf %34, %38 : vector<64x16xf32>
    %c1_37 = arith.constant 1 : index
    %c2_38 = arith.constant 2 : index
    %c0_39 = arith.constant 0 : index
    %40 = vector.load %arg8[%c1_37, %c2_38, %c0_39] : memref<10x10x16xbf16, #tpu.memory_space<vmem>>, vector<8x8x16xbf16>
    %41 = vector.shape_cast %40 : vector<8x8x16xbf16> to vector<64x16xbf16>
    %c80 = arith.constant 80 : index
    %c0_40 = arith.constant 0 : index
    %42 = vector.load %arg3[%c80, %c0_40] : memref<144x16xbf16, #tpu.memory_space<vmem>>, vector<16x16xbf16>
    %cst_41 = arith.constant dense<0.000000e+00> : vector<64x16xf32>
    %43 = tpu.matmul %41, %42, %cst_41 {dimension_numbers = #tpu.dot_dimension_numbers<[1], [0], [0], [1], [0, 0, 1, 1], [], []>} : vector<64x16xbf16>, vector<16x16xbf16>, vector<64x16xf32> -> vector<64x16xf32>
    %44 = arith.addf %39, %43 : vector<64x16xf32>
    %c2_42 = arith.constant 2 : index
    %c0_43 = arith.constant 0 : index
    %c0_44 = arith.constant 0 : index
    %45 = vector.load %arg8[%c2_42, %c0_43, %c0_44] : memref<10x10x16xbf16, #tpu.memory_space<vmem>>, vector<8x8x16xbf16>
    %46 = vector.shape_cast %45 : vector<8x8x16xbf16> to vector<64x16xbf16>
    %c96 = arith.constant 96 : index
    %c0_45 = arith.constant 0 : index
    %47 = vector.load %arg3[%c96, %c0_45] : memref<144x16xbf16, #tpu.memory_space<vmem>>, vector<16x16xbf16>
    %cst_46 = arith.constant dense<0.000000e+00> : vector<64x16xf32>
    %48 = tpu.matmul %46, %47, %cst_46 {dimension_numbers = #tpu.dot_dimension_numbers<[1], [0], [0], [1], [0, 0, 1, 1], [], []>} : vector<64x16xbf16>, vector<16x16xbf16>, vector<64x16xf32> -> vector<64x16xf32>
    %49 = arith.addf %44, %48 : vector<64x16xf32>
    %c2_47 = arith.constant 2 : index
    %c1_48 = arith.constant 1 : index
    %c0_49 = arith.constant 0 : index
    %50 = vector.load %arg8[%c2_47, %c1_48, %c0_49] : memref<10x10x16xbf16, #tpu.memory_space<vmem>>, vector<8x8x16xbf16>
    %51 = vector.shape_cast %50 : vector<8x8x16xbf16> to vector<64x16xbf16>
    %c112 = arith.constant 112 : index
    %c0_50 = arith.constant 0 : index
    %52 = vector.load %arg3[%c112, %c0_50] : memref<144x16xbf16, #tpu.memory_space<vmem>>, vector<16x16xbf16>
    %cst_51 = arith.constant dense<0.000000e+00> : vector<64x16xf32>
    %53 = tpu.matmul %51, %52, %cst_51 {dimension_numbers = #tpu.dot_dimension_numbers<[1], [0], [0], [1], [0, 0, 1, 1], [], []>} : vector<64x16xbf16>, vector<16x16xbf16>, vector<64x16xf32> -> vector<64x16xf32>
    %54 = arith.addf %49, %53 : vector<64x16xf32>
    %c2_52 = arith.constant 2 : index
    %c2_53 = arith.constant 2 : index
    %c0_54 = arith.constant 0 : index
    %55 = vector.load %arg8[%c2_52, %c2_53, %c0_54] : memref<10x10x16xbf16, #tpu.memory_space<vmem>>, vector<8x8x16xbf16>
    %56 = vector.shape_cast %55 : vector<8x8x16xbf16> to vector<64x16xbf16>
    %c128 = arith.constant 128 : index
    %c0_55 = arith.constant 0 : index
    %57 = vector.load %arg3[%c128, %c0_55] : memref<144x16xbf16, #tpu.memory_space<vmem>>, vector<16x16xbf16>
    %cst_56 = arith.constant dense<0.000000e+00> : vector<64x16xf32>
    %58 = tpu.matmul %56, %57, %cst_56 {dimension_numbers = #tpu.dot_dimension_numbers<[1], [0], [0], [1], [0, 0, 1, 1], [], []>} : vector<64x16xbf16>, vector<16x16xbf16>, vector<64x16xf32> -> vector<64x16xf32>
    %59 = arith.addf %54, %58 : vector<64x16xf32>
    %c0_57 = arith.constant 0 : index
    %c0_58 = arith.constant 0 : index
    %60 = vector.load %arg4[%c0_57, %c0_58] : memref<1x16xf32, #tpu.memory_space<vmem>>, vector<1x16xf32>
    %61 = vector.broadcast %60 : vector<1x16xf32> to vector<64x16xf32>
    %62 = arith.mulf %59, %61 : vector<64x16xf32>
    %c0_59 = arith.constant 0 : index
    %c0_60 = arith.constant 0 : index
    %63 = vector.load %arg5[%c0_59, %c0_60] : memref<1x16xf32, #tpu.memory_space<vmem>>, vector<1x16xf32>
    %64 = vector.broadcast %63 : vector<1x16xf32> to vector<64x16xf32>
    %65 = arith.addf %62, %64 : vector<64x16xf32>
    %cst_61 = arith.constant 0.000000e+00 : f32
    %66 = vector.broadcast %cst_61 : f32 to vector<64x16xf32>
    %67 = arith.maximumf %65, %66 : vector<64x16xf32>
    %68 = vector.shape_cast %67 : vector<64x16xf32> to vector<8x8x16xf32>
    %69 = arith.truncf %68 : vector<8x8x16xf32> to vector<8x8x16xbf16>
    %c0_62 = arith.constant 0 : index
    %c0_63 = arith.constant 0 : index
    %c0_64 = arith.constant 0 : index
    %c0_65 = arith.constant 0 : index
    %70 = vector.load %arg6[%c0_62, %c0_63, %c0_64, %c0_65] : memref<1x8x8x16xbf16, #tpu.memory_space<vmem>>, vector<1x8x8x16xbf16>
    %71 = vector.shape_cast %70 : vector<1x8x8x16xbf16> to vector<8x8x16xbf16>
    %72 = vector.shape_cast %69 : vector<8x8x16xbf16> to vector<1x8x8x16xbf16>
    tpu.vector_store %arg6[%c0_62, %c0_63, %c0_64, %c0_65], %72 {strides = array<i32>} : memref<1x8x8x16xbf16, #tpu.memory_space<vmem>>, vector<1x8x8x16xbf16>,
    %73 = vector.shape_cast %68 : vector<8x8x16xf32> to vector<4x2x8x16xf32>
    %cst_66 = arith.constant dense<0xFF800000> : vector<4x8x16xf32>
    %74 = vector.multi_reduction <maximumf>, %73, %cst_66 [1] : vector<4x2x8x16xf32> to vector<4x8x16xf32>
    %75 = vector.shape_cast %74 : vector<4x8x16xf32> to vector<4x4x2x16xf32>
    %cst_67 = arith.constant dense<0xFF800000> : vector<4x4x16xf32>
    %76 = vector.multi_reduction <maximumf>, %75, %cst_67 [2] : vector<4x4x2x16xf32> to vector<4x4x16xf32>
    %77 = arith.truncf %76 : vector<4x4x16xf32> to vector<4x4x16xbf16>
    %c0_68 = arith.constant 0 : index
    %c0_69 = arith.constant 0 : index
    %c0_70 = arith.constant 0 : index
    %c0_71 = arith.constant 0 : index
    %78 = vector.load %arg7[%c0_68, %c0_69, %c0_70, %c0_71] : memref<1x4x4x16xbf16, #tpu.memory_space<vmem>>, vector<1x4x4x16xbf16>
    %79 = vector.shape_cast %78 : vector<1x4x4x16xbf16> to vector<4x4x16xbf16>
    %80 = vector.shape_cast %77 : vector<4x4x16xbf16> to vector<1x4x4x16xbf16>
    tpu.vector_store %arg7[%c0_68, %c0_69, %c0_70, %c0_71], %80 {strides = array<i32>} : memref<1x4x4x16xbf16, #tpu.memory_space<vmem>>, vector<1x4x4x16xbf16>,
    return
  }
  func.func @transform_0(%arg0: i32, %arg1: i32) -> (i32, i32, i32, i32) {
    %c0_i32 = arith.constant 0 : i32
    %c0_i32_0 = arith.constant 0 : i32
    %c0_i32_1 = arith.constant 0 : i32
    %c0_i32_2 = arith.constant 0 : i32
    return %arg0, %c0_i32, %c0_i32_0, %c0_i32_1 : i32, i32, i32, i32
  }
  func.func @transform_1(%arg0: i32, %arg1: i32) -> (i32, i32) {
    %c0_i32 = arith.constant 0 : i32
    %c0_i32_0 = arith.constant 0 : i32
    %c0_i32_1 = arith.constant 0 : i32
    return %c0_i32, %c0_i32_0 : i32, i32
  }
  func.func @transform_2(%arg0: i32, %arg1: i32) -> (i32, i32) {
    %c0_i32 = arith.constant 0 : i32
    %c0_i32_0 = arith.constant 0 : i32
    %c0_i32_1 = arith.constant 0 : i32
    return %c0_i32, %c0_i32_0 : i32, i32
  }
  func.func @transform_3(%arg0: i32, %arg1: i32) -> (i32, i32) {
    %c0_i32 = arith.constant 0 : i32
    %c0_i32_0 = arith.constant 0 : i32
    %c0_i32_1 = arith.constant 0 : i32
    return %c0_i32, %c0_i32_0 : i32, i32
  }
  func.func @transform_4(%arg0: i32, %arg1: i32) -> (i32, i32, i32, i32) {
    %c0_i32 = arith.constant 0 : i32
    %c0_i32_0 = arith.constant 0 : i32
    %c0_i32_1 = arith.constant 0 : i32
    return %arg0, %arg1, %c0_i32, %c0_i32_0 : i32, i32, i32, i32
  }
  func.func @transform_5(%arg0: i32, %arg1: i32) -> (i32, i32, i32, i32) {
    %c0_i32 = arith.constant 0 : i32
    %c0_i32_0 = arith.constant 0 : i32
    %c0_i32_1 = arith.constant 0 : i32
    return %arg0, %arg1, %c0_i32, %c0_i32_0 : i32, i32, i32, i32
  }
}

</mosaic_0001>

<llo_original>
// kernel: tpu_custom_call.1
$region0: #{tpu_custom_call.1}
  #allocation0 [shape = 'u32[]', space=smem, size = 0x4, offset = 0x4, fixed_abs, tag = 'smem constant byte address 0x4 - core index']
  #allocation1 [shape = 'u32[72,128]{1,0:T(1,128)}', space=vmem, size = 0x9000, scoped, tag = 'internal scratch']
  #allocation2 [shape = 'bf16[10,10,16]{2,1,0:T(8,128)(2,1)}', space=vmem, size = 0xa000, scoped, tag = 'scratch operand']
  %s0 = inlined_call_operand.vmem [shape: bf16[2,8,8,16], index: 0, kind: input, shape index: {}]
  %s1 = inlined_call_operand.vmem [shape: bf16[144,16], index: 1, kind: input, shape index: {}]
  %s2 = inlined_call_operand.vmem [shape: f32[1,16], index: 2, kind: input, shape index: {}]
  %s3 = inlined_call_operand.vmem [shape: f32[1,16], index: 3, kind: input, shape index: {}]
  %s4 = inlined_call_operand.hbm [shape: bf16[2,8,8,16], index: 4, kind: output, shape index: {0}]
  %s5 = inlined_call_operand.hbm [shape: bf16[2,4,4,16], index: 5, kind: output, shape index: {1}]
  %6 = xla_tuple %s4, %s5
  %s7 = sld [smem:[#allocation0]]
  $region65: #{tpu_custom_call.1} parent=0
    _
  %s9 = ssub.s32 1, %s7
  %s10 = scalar_select 0, %s9, %s7
  $region1: #{tpu_custom_call.1} parent=0
    #allocation3 [shape = 'u8[32768]{0}', space=vmem, size = 0x8000, scoped, tag = 'output window, operand 0']
    #allocation4 [shape = 's32[2]{0}', space=sflag, size = 0x8, scoped, tag = 'scoped memory for tpu_custom_call.1']
    #allocation5 [shape = 'u8[8192]{0}', space=vmem, size = 0x2000, scoped, tag = 'output window, operand 1']
    #allocation6 [shape = 's32[2]{0}', space=sflag, size = 0x8, scoped, tag = 'scoped memory for tpu_custom_call.1']
    %11 = vsyncpa [#allocation4], 0
    %s12 = scalar_lea.sflag [#allocation4], 1
    %13 = vsyncpa %s12, 0
    %14 = vsyncpa [#allocation6], 0
    %s15 = scalar_lea.sflag [#allocation6], 1
    %16 = vsyncpa %s15, 0
    loop: start=0, step=1, limit=4
    $region2: #{tpu_custom_call.1} parent=1 // loop_pre_header
      _
    $region3: #{tpu_custom_call.1} parent=1 // loop_header
      %s18 = sphi 0, %s22
      %p19 = scmp.ge.s32.totalorder %s18, 4
      %s25 = sphi 0, %s37
      %s26 = sphi 0, %s33
      %s27 = sphi 0, %s25
      %s28 = sphi 0, %s26
      %s29 = sphi 0, %s27
      %s30 = sphi 0, %s28
      %s40 = sphi 0, %s42
      %s43 = sphi 0, %s40
      %s44 = sphi 0, %s43
      %s60 = sphi 0, %s44
      %s64 = sphi 0, %s64
      %s66 = sphi 0, %s64
      %s67 = sphi 0, %s66
      %s81 = sphi 0, %s67
      %s85 = sphi 0, %s85
      %s87 = sphi 0, %s85
      %s88 = sphi 0, %s87
      %s102 = sphi 0, %s88
      %s106 = sphi 0, %s106
      %s108 = sphi 0, %s106
      %s109 = sphi 0, %s108
      %s123 = sphi 0, %s109
      %s131 = sphi 0, %s133
      %s134 = sphi 0, %s131
      %s135 = sphi 0, %s134
      %s151 = sphi 0, %s135
      %s159 = sphi 0, %s161
      %s162 = sphi 0, %s159
      %s163 = sphi 0, %s162
      %s179 = sphi 0, %s163
    $region4: #{tpu_custom_call.1} parent=1 // loop_header_branch
      %21 = sbr.rel (%p19) target = $region8
    $region5: #{tpu_custom_call.1} parent=1 // loop_body
      %s23 = ssub.s32 %s18, 1
      %s24 = ssub.s32 %s18, 2
      %s31 = sadd.s32 1, %s26
      %p32 = scmp.ge.s32.totalorder %s31, 1
      %s33 = scalar_select %p32, 0, %s31
      %s34 = sadd.s32 1, %s25
      %s35 = scalar_select %p32, %s34, %s25
      %p36 = scmp.ge.s32.totalorder %s35, 2
      %s37 = scalar_select %p36, 0, %s35
      %s38 = ssub.s32 %s25, %s37
      %p39 = scmp.eq.s32.totalorder %s38, 0
      %s41 = sadd.s32 %s40, 1
      %s42 = scalar_select %p39, %s40, %s41
      %p45 = pneg %p39
      %p46 = scmp.eq.s32.totalorder %s18, 1
      %p47 = por %p45, %p46
      %p48 = scmp.ne.s32.totalorder %s40, %s43
      %p49 = scmp.eq.s32.totalorder %s18, 0
      %p50 = por %p48, %p49
      %p51 = scmp.ne.s32.totalorder %s40, %s43
      %p52 = scmp.eq.s32.totalorder %s23, 1
      %p53 = por %p51, %p52
      %p54 = scmp.ne.s32.totalorder %s43, %s44
      %p55 = scmp.eq.s32.totalorder %s23, 0
      %p56 = por %p54, %p55
      %p57 = scmp.ne.s32.totalorder %s43, %s44
      %p58 = scmp.eq.s32.totalorder %s24, 1
      %p59 = por %p57, %p58
      %p61 = scmp.ne.s32.totalorder %s44, %s60
      %p62 = scmp.eq.s32.totalorder %s24, 0
      %p63 = por %p61, %p62
      %s65 = sadd.s32 %s64, 1
      %p68 = scmp.eq.s32.totalorder %s18, 1
      %p69 = scmp.ne.s32.totalorder %s64, %s66
      %p70 = scmp.eq.s32.totalorder %s18, 0
      %p71 = por %p69, %p70
      %p72 = scmp.ne.s32.totalorder %s64, %s66
      %p73 = scmp.eq.s32.totalorder %s23, 1
      %p74 = por %p72, %p73
      %p75 = scmp.ne.s32.totalorder %s66, %s67
      %p76 = scmp.eq.s32.totalorder %s23, 0
      %p77 = por %p75, %p76
      %p78 = scmp.ne.s32.totalorder %s66, %s67
      %p79 = scmp.eq.s32.totalorder %s24, 1
      %p80 = por %p78, %p79
      %p82 = scmp.ne.s32.totalorder %s67, %s81
      %p83 = scmp.eq.s32.totalorder %s24, 0
      %p84 = por %p82, %p83
      %s86 = sadd.s32 %s85, 1
      %p89 = scmp.eq.s32.totalorder %s18, 1
      %p90 = scmp.ne.s32.totalorder %s85, %s87
      %p91 = scmp.eq.s32.totalorder %s18, 0
      %p92 = por %p90, %p91
      %p93 = scmp.ne.s32.totalorder %s85, %s87
      %p94 = scmp.eq.s32.totalorder %s23, 1
      %p95 = por %p93, %p94
      %p96 = scmp.ne.s32.totalorder %s87, %s88
      %p97 = scmp.eq.s32.totalorder %s23, 0
      %p98 = por %p96, %p97
      %p99 = scmp.ne.s32.totalorder %s87, %s88
      %p100 = scmp.eq.s32.totalorder %s24, 1
      %p101 = por %p99, %p100
      %p103 = scmp.ne.s32.totalorder %s88, %s102
      %p104 = scmp.eq.s32.totalorder %s24, 0
      %p105 = por %p103, %p104
      %s107 = sadd.s32 %s106, 1
      %p110 = scmp.eq.s32.totalorder %s18, 1
      %p111 = scmp.ne.s32.totalorder %s106, %s108
      %p112 = scmp.eq.s32.totalorder %s18, 0
      %p113 = por %p111, %p112
      %p114 = scmp.ne.s32.totalorder %s106, %s108
      %p115 = scmp.eq.s32.totalorder %s23, 1
      %p116 = por %p114, %p115
      %p117 = scmp.ne.s32.totalorder %s108, %s109
      %p118 = scmp.eq.s32.totalorder %s23, 0
      %p119 = por %p117, %p118
      %p120 = scmp.ne.s32.totalorder %s108, %s109
      %p121 = scmp.eq.s32.totalorder %s24, 1
      %p122 = por %p120, %p121
      %p124 = scmp.ne.s32.totalorder %s109, %s123
      %p125 = scmp.eq.s32.totalorder %s24, 0
      %p126 = por %p124, %p125
      %s127 = ssub.s32 %s25, %s37
      %s128 = ssub.s32 %s26, %s33
      %s129 = sor.u32 %s127, %s128
      %p130 = scmp.eq.s32.totalorder %s129, 0
      %s132 = sadd.s32 %s131, 1
      %s133 = scalar_select %p130, %s131, %s132
      %p136 = pneg %p130
      %p137 = scmp.eq.s32.totalorder %s18, 1
      %p138 = por %p136, %p137
      %p139 = scmp.ne.s32.totalorder %s131, %s134
      %p140 = scmp.eq.s32.totalorder %s18, 0
      %p141 = por %p139, %p140
      %p142 = scmp.ne.s32.totalorder %s131, %s134
      %p143 = scmp.eq.s32.totalorder %s23, 1
      %p144 = por %p142, %p143
      %p145 = scmp.ne.s32.totalorder %s134, %s135
      %p146 = scmp.eq.s32.totalorder %s23, 0
      %p147 = por %p145, %p146
      %p148 = scmp.ne.s32.totalorder %s134, %s135
      %p149 = scmp.eq.s32.totalorder %s24, 1
      %p150 = por %p148, %p149
      %p152 = scmp.ne.s32.totalorder %s135, %s151
      %p153 = scmp.eq.s32.totalorder %s24, 0
      %p154 = por %p152, %p153
      %s155 = ssub.s32 %s25, %s37
      %s156 = ssub.s32 %s26, %s33
      %s157 = sor.u32 %s155, %s156
      %p158 = scmp.eq.s32.totalorder %s157, 0
      %s160 = sadd.s32 %s159, 1
      %s161 = scalar_select %p158, %s159, %s160
      %p164 = pneg %p158
      %p165 = scmp.eq.s32.totalorder %s18, 1
      %p166 = por %p164, %p165
      %p167 = scmp.ne.s32.totalorder %s159, %s162
      %p168 = scmp.eq.s32.totalorder %s18, 0
      %p169 = por %p167, %p168
      %p170 = scmp.ne.s32.totalorder %s159, %s162
      %p171 = scmp.eq.s32.totalorder %s23, 1
      %p172 = por %p170, %p171
      %p173 = scmp.ne.s32.totalorder %s162, %s163
      %p174 = scmp.eq.s32.totalorder %s23, 0
      %p175 = por %p173, %p174
      %p176 = scmp.ne.s32.totalorder %s162, %s163
      %p177 = scmp.eq.s32.totalorder %s24, 1
      %p178 = por %p176, %p177
      %p180 = scmp.ne.s32.totalorder %s163, %s179
      %p181 = scmp.eq.s32.totalorder %s24, 0
      %p182 = por %p180, %p181
      %p183 = scmp.le.s32.totalorder 1, %s18
      %p184 = scmp.lt.s32.totalorder %s18, 3
      %p185 = pnand %p183, %p184
      %p186 = pneg %p185
      // Predicated region
      $region9: #{tpu_custom_call.1} parent=5 // pred_check
        _
      $region10: #{tpu_custom_call.1} parent=5 // pred_check_branch
        %188 = sbr.rel (%p185) target = $region12
      $region11: #{tpu_custom_call.1} parent=5 // pred_region
        %s189 = ssub.s32 %s18, 1
        // Predicated region
        $region13: #{tpu_custom_call.1} parent=11 // pred_check
          %p190 = pneg %p77
        $region14: #{tpu_custom_call.1} parent=11 // pred_check_branch
          %192 = sbr.rel (%p190) target = $region16
        $region15: #{tpu_custom_call.1} parent=11 // pred_region
          _
        $region16: #{tpu_custom_call.1} parent=11 // pred_fallthru
          _
        // Predicated region
        $region17: #{tpu_custom_call.1} parent=11 // pred_check
          %p193 = pneg %p98
        $region18: #{tpu_custom_call.1} parent=11 // pred_check_branch
          %195 = sbr.rel (%p193) target = $region20
        $region19: #{tpu_custom_call.1} parent=11 // pred_region
          _
        $region20: #{tpu_custom_call.1} parent=11 // pred_fallthru
          _
        // Predicated region
        $region21: #{tpu_custom_call.1} parent=11 // pred_check
          %p196 = pneg %p119
        $region22: #{tpu_custom_call.1} parent=11 // pred_check_branch
          %198 = sbr.rel (%p196) target = $region24
        $region23: #{tpu_custom_call.1} parent=11 // pred_region
          _
        $region24: #{tpu_custom_call.1} parent=11 // pred_fallthru
          _
      $region12: #{tpu_custom_call.1} parent=5 // pred_fallthru
        _
      %p199 = scmp.lt.s32.totalorder %s18, 2
      // Predicated region
      $region25: #{tpu_custom_call.1} parent=5 // pred_check
        %p200 = pneg %p199
      $region26: #{tpu_custom_call.1} parent=5 // pred_check_branch
        %202 = sbr.rel (%p200) target = $region28
      $region27: #{tpu_custom_call.1} parent=5 // pred_region
        // Predicated region
        $region29: #{tpu_custom_call.1} parent=27 // pred_check
          %p203 = pneg %p50
        $region30: #{tpu_custom_call.1} parent=27 // pred_check_branch
          %205 = sbr.rel (%p203) target = $region32
        $region31: #{tpu_custom_call.1} parent=27 // pred_region
          %p206 = scmp.lt.s32.totalorder %s25, 1
          %s207 = scalar_select %p206, %s25, 1
          %s208 = smul.addr %s207, 8
          %s209 = smul.addr %s208, 4
          %s210 = scalar_lea.vmem %s0, %s209
        $region32: #{tpu_custom_call.1} parent=27 // pred_fallthru
          _
      $region28: #{tpu_custom_call.1} parent=5 // pred_fallthru
        _
      %p211 = scmp.le.s32.totalorder 1, %s18
      %p212 = scmp.lt.s32.totalorder %s18, 3
      %p213 = pnand %p211, %p212
      %p214 = pneg %p213
      // Predicated region
      $region33: #{tpu_custom_call.1} parent=5 // pred_check
        _
      $region34: #{tpu_custom_call.1} parent=5 // pred_check_branch
        %216 = sbr.rel (%p213) target = $region36
      $region35: #{tpu_custom_call.1} parent=5 // pred_region
        %s217 = ssub.s32 %s18, 1
        %p218 = scmp.lt.s32.totalorder %s27, 1
        %s219 = scalar_select %p218, %s27, 1
        %s220 = smul.addr %s219, 8
        %s221 = smul.addr %s220, 4
        %s222 = scalar_lea.vmem %s0, %s221
        %p223 = pneg %p56
        %p224 = pneg %p53
        %p225 = pneg %p77
        %p226 = pneg %p74
        %p227 = pneg %p98
        %p228 = pneg %p95
        %p229 = pneg %p119
        %p230 = pneg %p116
        %p231 = pneg %p147
        %p232 = pneg %p144
        %s233 = sand.u32 %s134, 1
        %s234 = scalar_lea.sflag [#allocation4], %s233
        %s235 = sand.u32 %s134, 1
        %s236 = smul.addr %s235, 32
        %s237 = scalar_lea.vmem [#allocation3], %s236
        %p238 = pneg %p175
        %p239 = pneg %p172
        %s240 = sand.u32 %s162, 1
        %s241 = scalar_lea.sflag [#allocation6], %s240
        %s242 = sand.u32 %s162, 1
        %s243 = smul.addr %s242, 8
        %s244 = scalar_lea.vmem [#allocation5], %s243
        %p245 = scmp.lt.s32.totalorder %s27, 1
        %s246 = scalar_select %p245, %s27, 1
        %s247 = smul.addr %s246, 8
        %s248 = smul.addr %s247, 4
        %s249 = scalar_lea.vmem %s0, %s248
        %s250 = smul.u32 8, %s28
        %s251 = smul.u32 4, %s28
        %s253 = smul.u32 %s28, 8
        %vm254 = vcmask 125952
        %255 = vst.msk [vmem:[#allocation2] sm:$0xf] %vm254, 0
        %vm256 = vcmask 122880
        %257 = vst.msk [vmem:[#allocation2 + $0x4] sm:$0x1] %vm256, 0
        %258 = vst.msk [vmem:[#allocation2 + $0x8] sm:$0xf] %vm254, 0
        %259 = vst.msk [vmem:[#allocation2 + $0xc] sm:$0x1] %vm256, 0
        %260 = vst.msk [vmem:[#allocation2 + $0x10] sm:$0xf] %vm254, 0
        %261 = vst.msk [vmem:[#allocation2 + $0x14] sm:$0x1] %vm256, 0
        %262 = vst.msk [vmem:[#allocation2 + $0x18] sm:$0xf] %vm254, 0
        %263 = vst.msk [vmem:[#allocation2 + $0x1c] sm:$0x1] %vm256, 0
        %264 = vst.msk [vmem:[#allocation2 + $0x20] sm:$0xf] %vm254, 0
        %265 = vst.msk [vmem:[#allocation2 + $0x24] sm:$0x1] %vm256, 0
        %266 = vst.msk [vmem:[#allocation2 + $0x28] sm:$0xf] %vm254, 0
        %267 = vst.msk [vmem:[#allocation2 + $0x2c] sm:$0x1] %vm256, 0
        %268 = vst.msk [vmem:[#allocation2 + $0x30] sm:$0xf] %vm254, 0
        %269 = vst.msk [vmem:[#allocation2 + $0x34] sm:$0x1] %vm256, 0
        %270 = vst.msk [vmem:[#allocation2 + $0x38] sm:$0xf] %vm254, 0
        %271 = vst.msk [vmem:[#allocation2 + $0x3c] sm:$0x1] %vm256, 0
        %272 = vst.msk [vmem:[#allocation2 + $0x40] sm:$0xf] %vm254, 0
        %273 = vst.msk [vmem:[#allocation2 + $0x44] sm:$0x1] %vm256, 0
        %274 = vst.msk [vmem:[#allocation2 + $0x48] sm:$0xf] %vm254, 0
        %275 = vst.msk [vmem:[#allocation2 + $0x4c] sm:$0x1] %vm256, 0
        %s276 = smul.addr %s253, 4
        %s277 = scalar_lea.vmem %s249, %s276
        %v278 = vld [vmem:[%s277] sm:$0xf]
        %v279 = vld [vmem:[%s277 + $0x4] sm:$0xf]
        %v280 = vld [vmem:[%s277 + $0x8] sm:$0xf]
        %v281 = vld [vmem:[%s277 + $0xc] sm:$0xf]
        %v282 = vld [vmem:[%s277 + $0x10] sm:$0xf]
        %v283 = vld [vmem:[%s277 + $0x14] sm:$0xf]
        %v284 = vld [vmem:[%s277 + $0x18] sm:$0xf]
        %v285 = vld [vmem:[%s277 + $0x1c] sm:$0xf]
        %v287 = vshrl.u32 %v278, 16
        %v289 = vrot.slane %v287, 7
        %v290 = vshll.u32 %v278, 16
        %v292 = vor.u32 %v289, %v290
        %v293 = vrot.slane %v289, 4
        %v295 = vshrl.u32 %v279, 16
        %v297 = vrot.slane %v295, 7
        %v298 = vshll.u32 %v279, 16
        %v300 = vor.u32 %v297, %v298
        %v301 = vrot.slane %v297, 4
        %v303 = vshrl.u32 %v280, 16
        %v305 = vrot.slane %v303, 7
        %v306 = vshll.u32 %v280, 16
        %v308 = vor.u32 %v305, %v306
        %v309 = vrot.slane %v305, 4
        %v311 = vshrl.u32 %v281, 16
        %v313 = vrot.slane %v311, 7
        %v314 = vshll.u32 %v281, 16
        %v316 = vor.u32 %v313, %v314
        %v317 = vrot.slane %v313, 4
        %v319 = vshrl.u32 %v282, 16
        %v321 = vrot.slane %v319, 7
        %v322 = vshll.u32 %v282, 16
        %v324 = vor.u32 %v321, %v322
        %v325 = vrot.slane %v321, 4
        %v327 = vshrl.u32 %v283, 16
        %v329 = vrot.slane %v327, 7
        %v330 = vshll.u32 %v283, 16
        %v332 = vor.u32 %v329, %v330
        %v333 = vrot.slane %v329, 4
        %v335 = vshrl.u32 %v284, 16
        %v337 = vrot.slane %v335, 7
        %v338 = vshll.u32 %v284, 16
        %v340 = vor.u32 %v337, %v338
        %v341 = vrot.slane %v337, 4
        %v343 = vshrl.u32 %v285, 16
        %v345 = vrot.slane %v343, 7
        %v346 = vshll.u32 %v285, 16
        %v348 = vor.u32 %v345, %v346
        %v349 = vrot.slane %v345, 4
        %s366 = scalar_lea.vmem [#allocation2], 8
        %vm367 = vcmask 125952
        %vm368 = vsmask.f32 7938
        %vm369 = vmand %vm367, %vm368
        %v370 = vld [vmem:[%s366] sm:$0xf]
        %v371 = vsel %vm369, %v292, %v370
        %372 = vst [vmem:[%s366] sm:$0xf] %v371
        %vm373 = vcmask 122880
        %vm374 = vsmask.f32 256
        %vm375 = vmand %vm373, %vm374
        %v376 = vld [vmem:[%s366 + $0x4] sm:$0x1]
        %v377 = vsel %vm375, %v293, %v376
        %378 = vst [vmem:[%s366 + $0x4] sm:$0x1] %v377
        %v379 = vld [vmem:[%s366 + $0x8] sm:$0xf]
        %v380 = vsel %vm369, %v300, %v379
        %381 = vst [vmem:[%s366 + $0x8] sm:$0xf] %v380
        %v382 = vld [vmem:[%s366 + $0xc] sm:$0x1]
        %v383 = vsel %vm375, %v301, %v382
        %384 = vst [vmem:[%s366 + $0xc] sm:$0x1] %v383
        %v385 = vld [vmem:[%s366 + $0x10] sm:$0xf]
        %v386 = vsel %vm369, %v308, %v385
        %387 = vst [vmem:[%s366 + $0x10] sm:$0xf] %v386
        %v388 = vld [vmem:[%s366 + $0x14] sm:$0x1]
        %v389 = vsel %vm375, %v309, %v388
        %390 = vst [vmem:[%s366 + $0x14] sm:$0x1] %v389
        %v391 = vld [vmem:[%s366 + $0x18] sm:$0xf]
        %v392 = vsel %vm369, %v316, %v391
        %393 = vst [vmem:[%s366 + $0x18] sm:$0xf] %v392
        %v394 = vld [vmem:[%s366 + $0x1c] sm:$0x1]
        %v395 = vsel %vm375, %v317, %v394
        %396 = vst [vmem:[%s366 + $0x1c] sm:$0x1] %v395
        %v397 = vld [vmem:[%s366 + $0x20] sm:$0xf]
        %v398 = vsel %vm369, %v324, %v397
        %399 = vst [vmem:[%s366 + $0x20] sm:$0xf] %v398
        %v400 = vld [vmem:[%s366 + $0x24] sm:$0x1]
        %v401 = vsel %vm375, %v325, %v400
        %402 = vst [vmem:[%s366 + $0x24] sm:$0x1] %v401
        %v403 = vld [vmem:[%s366 + $0x28] sm:$0xf]
        %v404 = vsel %vm369, %v332, %v403
        %405 = vst [vmem:[%s366 + $0x28] sm:$0xf] %v404
        %v406 = vld [vmem:[%s366 + $0x2c] sm:$0x1]
        %v407 = vsel %vm375, %v333, %v406
        %408 = vst [vmem:[%s366 + $0x2c] sm:$0x1] %v407
        %v409 = vld [vmem:[%s366 + $0x30] sm:$0xf]
        %v410 = vsel %vm369, %v340, %v409
        %411 = vst [vmem:[%s366 + $0x30] sm:$0xf] %v410
        %v412 = vld [vmem:[%s366 + $0x34] sm:$0x1]
        %v413 = vsel %vm375, %v341, %v412
        %414 = vst [vmem:[%s366 + $0x34] sm:$0x1] %v413
        %v415 = vld [vmem:[%s366 + $0x38] sm:$0xf]
        %v416 = vsel %vm369, %v348, %v415
        %417 = vst [vmem:[%s366 + $0x38] sm:$0xf] %v416
        %v418 = vld [vmem:[%s366 + $0x3c] sm:$0x1]
        %v419 = vsel %vm375, %v349, %v418
        %420 = vst [vmem:[%s366 + $0x3c] sm:$0x1] %v419
        %p421 = scmp.gt.s32.totalorder %s253, 0
        // Predicated region
        $region37: #{tpu_custom_call.1} parent=35 // pred_check
          %p422 = pneg %p421
        $region38: #{tpu_custom_call.1} parent=35 // pred_check_branch
          %424 = sbr.rel (%p422) target = $region40
        $region39: #{tpu_custom_call.1} parent=35 // pred_region
          %s425 = ssub.s32 %s253, 1
          %s426 = smul.addr %s425, 4
          %s427 = scalar_lea.vmem %s249, %s426
          %v428 = vld [vmem:[%s427] sm:$0xf]
          %v430 = vshrl.u32 %v428, 16
          %v432 = vrot.slane %v430, 7
          %v433 = vshll.u32 %v428, 16
          %v435 = vor.u32 %v432, %v433
          %v436 = vrot.slane %v432, 4
          %v439 = vld [vmem:[#allocation2] sm:$0xf]
          %v440 = vsel %vm369, %v435, %v439
          %441 = vst [vmem:[#allocation2] sm:$0xf] %v440
          %v442 = vld [vmem:[#allocation2 + $0x4] sm:$0x1]
          %v443 = vsel %vm375, %v436, %v442
          %444 = vst [vmem:[#allocation2 + $0x4] sm:$0x1] %v443
        $region40: #{tpu_custom_call.1} parent=35 // pred_fallthru
          _
        %s445 = sadd.s32 %s253, 8
        %p446 = scmp.lt.s32.totalorder %s445, 8
        // Predicated region
        $region41: #{tpu_custom_call.1} parent=35 // pred_check
          %p447 = pneg %p446
        $region42: #{tpu_custom_call.1} parent=35 // pred_check_branch
          %449 = sbr.rel (%p447) target = $region44
        $region43: #{tpu_custom_call.1} parent=35 // pred_region
          %s450 = smul.addr %s445, 4
          %s451 = scalar_lea.vmem %s249, %s450
          %v452 = vld [vmem:[%s451] sm:$0xf]
          %v454 = vshrl.u32 %v452, 16
          %v456 = vrot.slane %v454, 7
          %v457 = vshll.u32 %v452, 16
          %v459 = vor.u32 %v456, %v457
          %v460 = vrot.slane %v456, 4
          %s463 = scalar_lea.vmem [#allocation2], 72
          %v464 = vld [vmem:[%s463] sm:$0xf]
          %v465 = vsel %vm369, %v459, %v464
          %466 = vst [vmem:[%s463] sm:$0xf] %v465
          %v467 = vld [vmem:[%s463 + $0x4] sm:$0x1]
          %v468 = vsel %vm375, %v460, %v467
          %469 = vst [vmem:[%s463 + $0x4] sm:$0x1] %v468
        $region44: #{tpu_custom_call.1} parent=35 // pred_fallthru
          _
        %v470 = vld [vmem:[#allocation2] sm:$0xf]
        %v471 = vld [vmem:[#allocation2 + $0x8] sm:$0xf]
        %v472 = vld [vmem:[#allocation2 + $0x10] sm:$0xf]
        %v473 = vld [vmem:[#allocation2 + $0x18] sm:$0xf]
        %v474 = vld [vmem:[#allocation2 + $0x20] sm:$0xf]
        %v475 = vld [vmem:[#allocation2 + $0x28] sm:$0xf]
        %v476 = vld [vmem:[#allocation2 + $0x30] sm:$0xf]
        %v477 = vld [vmem:[#allocation2 + $0x38] sm:$0xf]
        %v478 = vld [vmem:[%s1] sm:$0xf]
        %v479 = vld [vmem:[%s1 + $0x4] sm:$0xf]
        %v480 = vld [vmem:[#allocation2 + $0x4] sm:$0x1]
        %v481 = vld [vmem:[#allocation2 + $0xc] sm:$0x1]
        %v482 = vld [vmem:[#allocation2 + $0x14] sm:$0x1]
        %v483 = vld [vmem:[#allocation2 + $0x1c] sm:$0x1]
        %v484 = vld [vmem:[#allocation2 + $0x24] sm:$0x1]
        %v485 = vld [vmem:[#allocation2 + $0x2c] sm:$0x1]
        %v486 = vld [vmem:[#allocation2 + $0x34] sm:$0x1]
        %v487 = vld [vmem:[#allocation2 + $0x3c] sm:$0x1]
        %vm488 = vsmask.f32 3328
        %vm489 = vsmask.f32 7440
        %vm490 = vmor %vm488, %vm489
        %v492 = vshrl.u32 %v470, 16
        %v494 = vrot.slane %v492, 4
        %v495 = vshll.u32 %v470, 16
        %v497 = vrot.slane %v495, 5
        %v498 = vor.u32 %v494, %v497
        %v499 = vrot.slane %v498, 4
        %v501 = vshll.u32 %v480, 16
        %v503 = vrot.slane %v501, 5
        %v504 = vsel %vm490, %v499, %v503
        %v506 = vshrl.u32 %v471, 16
        %v508 = vrot.slane %v506, 4
        %v509 = vshll.u32 %v471, 16
        %v511 = vrot.slane %v509, 5
        %v512 = vor.u32 %v508, %v511
        %v513 = vrot.slane %v512, 4
        %v515 = vshll.u32 %v481, 16
        %v517 = vrot.slane %v515, 5
        %v518 = vsel %vm490, %v513, %v517
        %v520 = vshrl.u32 %v472, 16
        %v522 = vrot.slane %v520, 4
        %v523 = vshll.u32 %v472, 16
        %v525 = vrot.slane %v523, 5
        %v526 = vor.u32 %v522, %v525
        %v527 = vrot.slane %v526, 4
        %v529 = vshll.u32 %v482, 16
        %v531 = vrot.slane %v529, 5
        %v532 = vsel %vm490, %v527, %v531
        %v534 = vshrl.u32 %v473, 16
        %v536 = vrot.slane %v534, 4
        %v537 = vshll.u32 %v473, 16
        %v539 = vrot.slane %v537, 5
        %v540 = vor.u32 %v536, %v539
        %v541 = vrot.slane %v540, 4
        %v543 = vshll.u32 %v483, 16
        %v545 = vrot.slane %v543, 5
        %v546 = vsel %vm490, %v541, %v545
        %v548 = vshrl.u32 %v474, 16
        %v550 = vrot.slane %v548, 4
        %v551 = vshll.u32 %v474, 16
        %v553 = vrot.slane %v551, 5
        %v554 = vor.u32 %v550, %v553
        %v555 = vrot.slane %v554, 4
        %v557 = vshll.u32 %v484, 16
        %v559 = vrot.slane %v557, 5
        %v560 = vsel %vm490, %v555, %v559
        %v562 = vshrl.u32 %v475, 16
        %v564 = vrot.slane %v562, 4
        %v565 = vshll.u32 %v475, 16
        %v567 = vrot.slane %v565, 5
        %v568 = vor.u32 %v564, %v567
        %v569 = vrot.slane %v568, 4
        %v571 = vshll.u32 %v485, 16
        %v573 = vrot.slane %v571, 5
        %v574 = vsel %vm490, %v569, %v573
        %v576 = vshrl.u32 %v476, 16
        %v578 = vrot.slane %v576, 4
        %v579 = vshll.u32 %v476, 16
        %v581 = vrot.slane %v579, 5
        %v582 = vor.u32 %v578, %v581
        %v583 = vrot.slane %v582, 4
        %v585 = vshll.u32 %v486, 16
        %v587 = vrot.slane %v585, 5
        %v588 = vsel %vm490, %v583, %v587
        %v590 = vshrl.u32 %v477, 16
        %v592 = vrot.slane %v590, 4
        %v593 = vshll.u32 %v477, 16
        %v595 = vrot.slane %v593, 5
        %v596 = vor.u32 %v592, %v595
        %v597 = vrot.slane %v596, 4
        %v599 = vshll.u32 %v487, 16
        %v601 = vrot.slane %v599, 5
        %v602 = vsel %vm490, %v597, %v601
        %v603 = vld [vmem:[%s1 + $0x8] sm:$0xf]
        %v604 = vld [vmem:[%s1 + $0xc] sm:$0xf]
        %v605 = vunpack.c.l.b16 %v504
        %v606 = vunpack.c.l.b16 %v518
        %v607 = vunpack.c.l.b16 %v532
        %v608 = vunpack.c.l.b16 %v546
        %v609 = vunpack.c.l.b16 %v560
        %v610 = vunpack.c.l.b16 %v574
        %v611 = vunpack.c.l.b16 %v588
        %v612 = vunpack.c.l.b16 %v602
        %v613 = vpack.c.b16 %v606, %v605
        %v614 = vpack.c.b16 %v608, %v607
        %v615 = vpack.c.b16 %v610, %v609
        %v616 = vpack.c.b16 %v612, %v611
        %v619 = vunpack.c.l.b16 %v603
        %v620 = vunpack.c.l.b16 %v604
        %v621 = vpack.c.b16 %v620, %v619
        %vm623 = vcmask 130048
        %v625 = vsel %vm623, %v613, 0
        %v628 = vsel %vm623, %v614, 0
        %v631 = vsel %vm623, %v615, 0
        %v634 = vsel %vm623, %v616, 0
        %636 = vmatpush.bf16.msra.mxu0 0
        %637 = vmatpush.bf16.msra.mxu0 0
        %638 = vmatpush.bf16.msra.mxu0 0
        %639 = vmatpush.bf16.msra.mxu0 0
        %640 = vmatpush.bf16.msra.mxu0 0
        %641 = vmatpush.bf16.msra.mxu0 0
        %642 = vmatpush.bf16.msra.mxu0 0
        %643 = vmatpush.bf16.msra.mxu0 %v621
        %644 = vmatmul.bf16.gmra.mxu0 %v625
        %v645 = vpop.f32.mrf.mxu0
        %v646 = vadd.f32 0.0, %v645
        %v647 = vpop.f32.mrf.mxu0
        %v648 = vadd.f32 0.0, %v647
        %649 = vmatmul.bf16.gmra.mxu0 %v628
        %v650 = vpop.f32.mrf.mxu0
        %v651 = vadd.f32 0.0, %v650
        %v652 = vpop.f32.mrf.mxu0
        %v653 = vadd.f32 0.0, %v652
        %654 = vmatmul.bf16.gmra.mxu0 %v631
        %v655 = vpop.f32.mrf.mxu0
        %v656 = vadd.f32 0.0, %v655
        %v657 = vpop.f32.mrf.mxu0
        %v658 = vadd.f32 0.0, %v657
        %659 = vmatmul.bf16.gmra.mxu0 %v634
        %v660 = vpop.f32.mrf.mxu0
        %v661 = vadd.f32 0.0, %v660
        %v662 = vpop.f32.mrf.mxu0
        %v663 = vadd.f32 0.0, %v662
        %664 = vdwg.mxu0
        %v673 = vunpack.c.l.b16 %v470
        %v674 = vunpack.c.l.b16 %v471
        %v675 = vunpack.c.l.b16 %v472
        %v676 = vunpack.c.l.b16 %v473
        %v677 = vunpack.c.l.b16 %v474
        %v678 = vunpack.c.l.b16 %v475
        %v679 = vunpack.c.l.b16 %v476
        %v680 = vunpack.c.l.b16 %v477
        %v681 = vpack.c.b16 %v674, %v673
        %v682 = vpack.c.b16 %v676, %v675
        %v683 = vpack.c.b16 %v678, %v677
        %v684 = vpack.c.b16 %v680, %v679
        %v687 = vunpack.c.l.b16 %v478
        %v688 = vunpack.c.l.b16 %v479
        %v689 = vpack.c.b16 %v688, %v687
        %v692 = vsel %vm623, %v681, 0
        %v695 = vsel %vm623, %v682, 0
        %v698 = vsel %vm623, %v683, 0
        %v701 = vsel %vm623, %v684, 0
        %703 = vmatpush.bf16.msra.mxu0 0
        %704 = vmatpush.bf16.msra.mxu0 0
        %705 = vmatpush.bf16.msra.mxu0 0
        %706 = vmatpush.bf16.msra.mxu0 0
        %707 = vmatpush.bf16.msra.mxu0 0
        %708 = vmatpush.bf16.msra.mxu0 0
        %709 = vmatpush.bf16.msra.mxu0 0
        %710 = vmatpush.bf16.msra.mxu0 %v689
        %711 = vmatmul.bf16.gmra.mxu0 %v692
        %v712 = vpop.f32.mrf.mxu0
        %v713 = vadd.f32 %v646, %v712
        %v714 = vpop.f32.mrf.mxu0
        %v715 = vadd.f32 %v648, %v714
        %716 = vmatmul.bf16.gmra.mxu0 %v695
        %v717 = vpop.f32.mrf.mxu0
        %v718 = vadd.f32 %v651, %v717
        %v719 = vpop.f32.mrf.mxu0
        %v720 = vadd.f32 %v653, %v719
        %721 = vmatmul.bf16.gmra.mxu0 %v698
        %v722 = vpop.f32.mrf.mxu0
        %v723 = vadd.f32 %v656, %v722
        %v724 = vpop.f32.mrf.mxu0
        %v725 = vadd.f32 %v658, %v724
        %726 = vmatmul.bf16.gmra.mxu0 %v701
        %v727 = vpop.f32.mrf.mxu0
        %v728 = vadd.f32 %v661, %v727
        %v729 = vpop.f32.mrf.mxu0
        %v730 = vadd.f32 %v663, %v729
        %731 = vdwg.mxu0
        %v732 = vld [vmem:[#allocation2] sm:$0xe]
        %v733 = vld [vmem:[#allocation2 + $0x8] sm:$0xe]
        %v734 = vld [vmem:[#allocation2 + $0x10] sm:$0xe]
        %v735 = vld [vmem:[#allocation2 + $0x18] sm:$0xe]
        %v736 = vld [vmem:[#allocation2 + $0x20] sm:$0xe]
        %v737 = vld [vmem:[#allocation2 + $0x28] sm:$0xe]
        %v738 = vld [vmem:[#allocation2 + $0x30] sm:$0xe]
        %v739 = vld [vmem:[#allocation2 + $0x38] sm:$0xe]
        %vm756 = vcmask 1042432
        %vm757 = vcmask 1046532
        %vm758 = vmor %vm756, %vm757
        %v759 = vrot.slane %v732, 5
        %v760 = vrot.slane %v759, 4
        %v761 = vrot.slane %v480, 5
        %v762 = vsel %vm758, %v760, %v761
        %v763 = vrot.slane %v733, 5
        %v764 = vrot.slane %v763, 4
        %v765 = vrot.slane %v481, 5
        %v766 = vsel %vm758, %v764, %v765
        %v767 = vrot.slane %v734, 5
        %v768 = vrot.slane %v767, 4
        %v769 = vrot.slane %v482, 5
        %v770 = vsel %vm758, %v768, %v769
        %v771 = vrot.slane %v735, 5
        %v772 = vrot.slane %v771, 4
        %v773 = vrot.slane %v483, 5
        %v774 = vsel %vm758, %v772, %v773
        %v775 = vrot.slane %v736, 5
        %v776 = vrot.slane %v775, 4
        %v777 = vrot.slane %v484, 5
        %v778 = vsel %vm758, %v776, %v777
        %v779 = vrot.slane %v737, 5
        %v780 = vrot.slane %v779, 4
        %v781 = vrot.slane %v485, 5
        %v782 = vsel %vm758, %v780, %v781
        %v783 = vrot.slane %v738, 5
        %v784 = vrot.slane %v783, 4
        %v785 = vrot.slane %v486, 5
        %v786 = vsel %vm758, %v784, %v785
        %v787 = vrot.slane %v739, 5
        %v788 = vrot.slane %v787, 4
        %v789 = vrot.slane %v487, 5
        %v790 = vsel %vm758, %v788, %v789
        %v791 = vld [vmem:[%s1 + $0x10] sm:$0xf]
        %v792 = vld [vmem:[%s1 + $0x14] sm:$0xf]
        %v793 = vunpack.c.l.b16 %v762
        %v794 = vunpack.c.l.b16 %v766
        %v795 = vunpack.c.l.b16 %v770
        %v796 = vunpack.c.l.b16 %v774
        %v797 = vunpack.c.l.b16 %v778
        %v798 = vunpack.c.l.b16 %v782
        %v799 = vunpack.c.l.b16 %v786
        %v800 = vunpack.c.l.b16 %v790
        %v801 = vpack.c.b16 %v794, %v793
        %v802 = vpack.c.b16 %v796, %v795
        %v803 = vpack.c.b16 %v798, %v797
        %v804 = vpack.c.b16 %v800, %v799
        %v807 = vunpack.c.l.b16 %v791
        %v808 = vunpack.c.l.b16 %v792
        %v809 = vpack.c.b16 %v808, %v807
        %v812 = vsel %vm623, %v801, 0
        %v815 = vsel %vm623, %v802, 0
        %v818 = vsel %vm623, %v803, 0
        %v821 = vsel %vm623, %v804, 0
        %823 = vmatpush.bf16.msra.mxu0 0
        %824 = vmatpush.bf16.msra.mxu0 0
        %825 = vmatpush.bf16.msra.mxu0 0
        %826 = vmatpush.bf16.msra.mxu0 0
        %827 = vmatpush.bf16.msra.mxu0 0
        %828 = vmatpush.bf16.msra.mxu0 0
        %829 = vmatpush.bf16.msra.mxu0 0
        %830 = vmatpush.bf16.msra.mxu0 %v809
        %831 = vmatmul.bf16.gmra.mxu0 %v812
        %v832 = vpop.f32.mrf.mxu0
        %v833 = vadd.f32 0.0, %v832
        %v834 = vpop.f32.mrf.mxu0
        %v835 = vadd.f32 0.0, %v834
        %836 = vmatmul.bf16.gmra.mxu0 %v815
        %v837 = vpop.f32.mrf.mxu0
        %v838 = vadd.f32 0.0, %v837
        %v839 = vpop.f32.mrf.mxu0
        %v840 = vadd.f32 0.0, %v839
        %841 = vmatmul.bf16.gmra.mxu0 %v818
        %v842 = vpop.f32.mrf.mxu0
        %v843 = vadd.f32 0.0, %v842
        %v844 = vpop.f32.mrf.mxu0
        %v845 = vadd.f32 0.0, %v844
        %846 = vmatmul.bf16.gmra.mxu0 %v821
        %v847 = vpop.f32.mrf.mxu0
        %v848 = vadd.f32 0.0, %v847
        %v849 = vpop.f32.mrf.mxu0
        %v850 = vadd.f32 0.0, %v849
        %851 = vdwg.mxu0
        %v852 = vadd.f32 %v713, %v833
        %v853 = vadd.f32 %v715, %v835
        %v854 = vadd.f32 %v718, %v838
        %v855 = vadd.f32 %v720, %v840
        %v856 = vadd.f32 %v723, %v843
        %v857 = vadd.f32 %v725, %v845
        %v858 = vadd.f32 %v728, %v848
        %v859 = vadd.f32 %v730, %v850
        %v860 = vld [vmem:[%s366] sm:$0xf]
        %v861 = vld [vmem:[%s366 + $0x8] sm:$0xf]
        %v862 = vld [vmem:[%s366 + $0x10] sm:$0xf]
        %v863 = vld [vmem:[%s366 + $0x18] sm:$0xf]
        %v864 = vld [vmem:[%s366 + $0x20] sm:$0xf]
        %v865 = vld [vmem:[%s366 + $0x28] sm:$0xf]
        %v866 = vld [vmem:[%s366 + $0x30] sm:$0xf]
        %v867 = vld [vmem:[%s366 + $0x38] sm:$0xf]
        %v868 = vld [vmem:[%s1 + $0x18] sm:$0xf]
        %v869 = vld [vmem:[%s1 + $0x1c] sm:$0xf]
        %v878 = vunpack.c.l.b16 %v860
        %v879 = vunpack.c.l.b16 %v861
        %v880 = vunpack.c.l.b16 %v862
        %v881 = vunpack.c.l.b16 %v863
        %v882 = vunpack.c.l.b16 %v864
        %v883 = vunpack.c.l.b16 %v865
        %v884 = vunpack.c.l.b16 %v866
        %v885 = vunpack.c.l.b16 %v867
        %v886 = vpack.c.b16 %v879, %v878
        %v887 = vpack.c.b16 %v881, %v880
        %v888 = vpack.c.b16 %v883, %v882
        %v889 = vpack.c.b16 %v885, %v884
        %v892 = vunpack.c.l.b16 %v868
        %v893 = vunpack.c.l.b16 %v869
        %v894 = vpack.c.b16 %v893, %v892
        %v897 = vsel %vm623, %v886, 0
        %v900 = vsel %vm623, %v887, 0
        %v903 = vsel %vm623, %v888, 0
        %v906 = vsel %vm623, %v889, 0
        %908 = vmatpush.bf16.msra.mxu0 0
        %909 = vmatpush.bf16.msra.mxu0 0
        %910 = vmatpush.bf16.msra.mxu0 0
        %911 = vmatpush.bf16.msra.mxu0 0
        %912 = vmatpush.bf16.msra.mxu0 0
        %913 = vmatpush.bf16.msra.mxu0 0
        %914 = vmatpush.bf16.msra.mxu0 0
        %915 = vmatpush.bf16.msra.mxu0 %v894
        %916 = vmatmul.bf16.gmra.mxu0 %v897
        %v917 = vpop.f32.mrf.mxu0
        %v918 = vadd.f32 0.0, %v917
        %v919 = vpop.f32.mrf.mxu0
        %v920 = vadd.f32 0.0, %v919
        %921 = vmatmul.bf16.gmra.mxu0 %v900
        %v922 = vpop.f32.mrf.mxu0
        %v923 = vadd.f32 0.0, %v922
        %v924 = vpop.f32.mrf.mxu0
        %v925 = vadd.f32 0.0, %v924
        %926 = vmatmul.bf16.gmra.mxu0 %v903
        %v927 = vpop.f32.mrf.mxu0
        %v928 = vadd.f32 0.0, %v927
        %v929 = vpop.f32.mrf.mxu0
        %v930 = vadd.f32 0.0, %v929
        %931 = vmatmul.bf16.gmra.mxu0 %v906
        %v932 = vpop.f32.mrf.mxu0
        %v933 = vadd.f32 0.0, %v932
        %v934 = vpop.f32.mrf.mxu0
        %v935 = vadd.f32 0.0, %v934
        %936 = vdwg.mxu0
        %v937 = vadd.f32 %v852, %v918
        %v938 = vadd.f32 %v853, %v920
        %v939 = vadd.f32 %v854, %v923
        %v940 = vadd.f32 %v855, %v925
        %v941 = vadd.f32 %v856, %v928
        %v942 = vadd.f32 %v857, %v930
        %v943 = vadd.f32 %v858, %v933
        %v944 = vadd.f32 %v859, %v935
        %v945 = vld [vmem:[%s366] sm:$0xf]
        %v946 = vld [vmem:[%s366 + $0x4] sm:$0x1]
        %v947 = vld [vmem:[%s366 + $0x8] sm:$0xf]
        %v948 = vld [vmem:[%s366 + $0xc] sm:$0x1]
        %v949 = vld [vmem:[%s366 + $0x10] sm:$0xf]
        %v950 = vld [vmem:[%s366 + $0x14] sm:$0x1]
        %v951 = vld [vmem:[%s366 + $0x18] sm:$0xf]
        %v952 = vld [vmem:[%s366 + $0x1c] sm:$0x1]
        %v953 = vld [vmem:[%s366 + $0x20] sm:$0xf]
        %v954 = vld [vmem:[%s366 + $0x24] sm:$0x1]
        %v955 = vld [vmem:[%s366 + $0x28] sm:$0xf]
        %v956 = vld [vmem:[%s366 + $0x2c] sm:$0x1]
        %v957 = vld [vmem:[%s366 + $0x30] sm:$0xf]
        %v958 = vld [vmem:[%s366 + $0x34] sm:$0x1]
        %v959 = vld [vmem:[%s366 + $0x38] sm:$0xf]
        %v960 = vld [vmem:[%s366 + $0x3c] sm:$0x1]
        %v962 = vshrl.u32 %v945, 16
        %v964 = vrot.slane %v962, 4
        %v965 = vshll.u32 %v945, 16
        %v967 = vrot.slane %v965, 5
        %v968 = vor.u32 %v964, %v967
        %v969 = vrot.slane %v968, 4
        %v971 = vshll.u32 %v946, 16
        %v973 = vrot.slane %v971, 5
        %v974 = vsel %vm490, %v969, %v973
        %v976 = vshrl.u32 %v947, 16
        %v978 = vrot.slane %v976, 4
        %v979 = vshll.u32 %v947, 16
        %v981 = vrot.slane %v979, 5
        %v982 = vor.u32 %v978, %v981
        %v983 = vrot.slane %v982, 4
        %v985 = vshll.u32 %v948, 16
        %v987 = vrot.slane %v985, 5
        %v988 = vsel %vm490, %v983, %v987
        %v990 = vshrl.u32 %v949, 16
        %v992 = vrot.slane %v990, 4
        %v993 = vshll.u32 %v949, 16
        %v995 = vrot.slane %v993, 5
        %v996 = vor.u32 %v992, %v995
        %v997 = vrot.slane %v996, 4
        %v999 = vshll.u32 %v950, 16
        %v1001 = vrot.slane %v999, 5
        %v1002 = vsel %vm490, %v997, %v1001
        %v1004 = vshrl.u32 %v951, 16
        %v1006 = vrot.slane %v1004, 4
        %v1007 = vshll.u32 %v951, 16
        %v1009 = vrot.slane %v1007, 5
        %v1010 = vor.u32 %v1006, %v1009
        %v1011 = vrot.slane %v1010, 4
        %v1013 = vshll.u32 %v952, 16
        %v1015 = vrot.slane %v1013, 5
        %v1016 = vsel %vm490, %v1011, %v1015
        %v1018 = vshrl.u32 %v953, 16
        %v1020 = vrot.slane %v1018, 4
        %v1021 = vshll.u32 %v953, 16
        %v1023 = vrot.slane %v1021, 5
        %v1024 = vor.u32 %v1020, %v1023
        %v1025 = vrot.slane %v1024, 4
        %v1027 = vshll.u32 %v954, 16
        %v1029 = vrot.slane %v1027, 5
        %v1030 = vsel %vm490, %v1025, %v1029
        %v1032 = vshrl.u32 %v955, 16
        %v1034 = vrot.slane %v1032, 4
        %v1035 = vshll.u32 %v955, 16
        %v1037 = vrot.slane %v1035, 5
        %v1038 = vor.u32 %v1034, %v1037
        %v1039 = vrot.slane %v1038, 4
        %v1041 = vshll.u32 %v956, 16
        %v1043 = vrot.slane %v1041, 5
        %v1044 = vsel %vm490, %v1039, %v1043
        %v1046 = vshrl.u32 %v957, 16
        %v1048 = vrot.slane %v1046, 4
        %v1049 = vshll.u32 %v957, 16
        %v1051 = vrot.slane %v1049, 5
        %v1052 = vor.u32 %v1048, %v1051
        %v1053 = vrot.slane %v1052, 4
        %v1055 = vshll.u32 %v958, 16
        %v1057 = vrot.slane %v1055, 5
        %v1058 = vsel %vm490, %v1053, %v1057
        %v1060 = vshrl.u32 %v959, 16
        %v1062 = vrot.slane %v1060, 4
        %v1063 = vshll.u32 %v959, 16
        %v1065 = vrot.slane %v1063, 5
        %v1066 = vor.u32 %v1062, %v1065
        %v1067 = vrot.slane %v1066, 4
        %v1069 = vshll.u32 %v960, 16
        %v1071 = vrot.slane %v1069, 5
        %v1072 = vsel %vm490, %v1067, %v1071
        %v1073 = vld [vmem:[%s1 + $0x20] sm:$0xf]
        %v1074 = vld [vmem:[%s1 + $0x24] sm:$0xf]
        %v1075 = vunpack.c.l.b16 %v974
        %v1076 = vunpack.c.l.b16 %v988
        %v1077 = vunpack.c.l.b16 %v1002
        %v1078 = vunpack.c.l.b16 %v1016
        %v1079 = vunpack.c.l.b16 %v1030
        %v1080 = vunpack.c.l.b16 %v1044
        %v1081 = vunpack.c.l.b16 %v1058
        %v1082 = vunpack.c.l.b16 %v1072
        %v1083 = vpack.c.b16 %v1076, %v1075
        %v1084 = vpack.c.b16 %v1078, %v1077
        %v1085 = vpack.c.b16 %v1080, %v1079
        %v1086 = vpack.c.b16 %v1082, %v1081
        %v1089 = vunpack.c.l.b16 %v1073
        %v1090 = vunpack.c.l.b16 %v1074
        %v1091 = vpack.c.b16 %v1090, %v1089
        %v1094 = vsel %vm623, %v1083, 0
        %v1097 = vsel %vm623, %v1084, 0
        %v1100 = vsel %vm623, %v1085, 0
        %v1103 = vsel %vm623, %v1086, 0
        %1105 = vmatpush.bf16.msra.mxu0 0
        %1106 = vmatpush.bf16.msra.mxu0 0
        %1107 = vmatpush.bf16.msra.mxu0 0
        %1108 = vmatpush.bf16.msra.mxu0 0
        %1109 = vmatpush.bf16.msra.mxu0 0
        %1110 = vmatpush.bf16.msra.mxu0 0
        %1111 = vmatpush.bf16.msra.mxu0 0
        %1112 = vmatpush.bf16.msra.mxu0 %v1091
        %1113 = vmatmul.bf16.gmra.mxu0 %v1094
        %v1114 = vpop.f32.mrf.mxu0
        %v1115 = vadd.f32 0.0, %v1114
        %v1116 = vpop.f32.mrf.mxu0
        %v1117 = vadd.f32 0.0, %v1116
        %1118 = vmatmul.bf16.gmra.mxu0 %v1097
        %v1119 = vpop.f32.mrf.mxu0
        %v1120 = vadd.f32 0.0, %v1119
        %v1121 = vpop.f32.mrf.mxu0
        %v1122 = vadd.f32 0.0, %v1121
        %1123 = vmatmul.bf16.gmra.mxu0 %v1100
        %v1124 = vpop.f32.mrf.mxu0
        %v1125 = vadd.f32 0.0, %v1124
        %v1126 = vpop.f32.mrf.mxu0
        %v1127 = vadd.f32 0.0, %v1126
        %1128 = vmatmul.bf16.gmra.mxu0 %v1103
        %v1129 = vpop.f32.mrf.mxu0
        %v1130 = vadd.f32 0.0, %v1129
        %v1131 = vpop.f32.mrf.mxu0
        %v1132 = vadd.f32 0.0, %v1131
        %1133 = vdwg.mxu0
        %v1134 = vadd.f32 %v937, %v1115
        %v1135 = vadd.f32 %v938, %v1117
        %v1136 = vadd.f32 %v939, %v1120
        %v1137 = vadd.f32 %v940, %v1122
        %v1138 = vadd.f32 %v941, %v1125
        %v1139 = vadd.f32 %v942, %v1127
        %v1140 = vadd.f32 %v943, %v1130
        %v1141 = vadd.f32 %v944, %v1132
        %v1142 = vld [vmem:[%s366] sm:$0xe]
        %v1143 = vld [vmem:[%s366 + $0x8] sm:$0xe]
        %v1144 = vld [vmem:[%s366 + $0x10] sm:$0xe]
        %v1145 = vld [vmem:[%s366 + $0x18] sm:$0xe]
        %v1146 = vld [vmem:[%s366 + $0x20] sm:$0xe]
        %v1147 = vld [vmem:[%s366 + $0x28] sm:$0xe]
        %v1148 = vld [vmem:[%s366 + $0x30] sm:$0xe]
        %v1149 = vld [vmem:[%s366 + $0x38] sm:$0xe]
        %v1166 = vrot.slane %v1142, 5
        %v1167 = vrot.slane %v1166, 4
        %v1168 = vrot.slane %v946, 5
        %v1169 = vsel %vm758, %v1167, %v1168
        %v1170 = vrot.slane %v1143, 5
        %v1171 = vrot.slane %v1170, 4
        %v1172 = vrot.slane %v948, 5
        %v1173 = vsel %vm758, %v1171, %v1172
        %v1174 = vrot.slane %v1144, 5
        %v1175 = vrot.slane %v1174, 4
        %v1176 = vrot.slane %v950, 5
        %v1177 = vsel %vm758, %v1175, %v1176
        %v1178 = vrot.slane %v1145, 5
        %v1179 = vrot.slane %v1178, 4
        %v1180 = vrot.slane %v952, 5
        %v1181 = vsel %vm758, %v1179, %v1180
        %v1182 = vrot.slane %v1146, 5
        %v1183 = vrot.slane %v1182, 4
        %v1184 = vrot.slane %v954, 5
        %v1185 = vsel %vm758, %v1183, %v1184
        %v1186 = vrot.slane %v1147, 5
        %v1187 = vrot.slane %v1186, 4
        %v1188 = vrot.slane %v956, 5
        %v1189 = vsel %vm758, %v1187, %v1188
        %v1190 = vrot.slane %v1148, 5
        %v1191 = vrot.slane %v1190, 4
        %v1192 = vrot.slane %v958, 5
        %v1193 = vsel %vm758, %v1191, %v1192
        %v1194 = vrot.slane %v1149, 5
        %v1195 = vrot.slane %v1194, 4
        %v1196 = vrot.slane %v960, 5
        %v1197 = vsel %vm758, %v1195, %v1196
        %v1198 = vld [vmem:[%s1 + $0x28] sm:$0xf]
        %v1199 = vld [vmem:[%s1 + $0x2c] sm:$0xf]
        %v1200 = vunpack.c.l.b16 %v1169
        %v1201 = vunpack.c.l.b16 %v1173
        %v1202 = vunpack.c.l.b16 %v1177
        %v1203 = vunpack.c.l.b16 %v1181
        %v1204 = vunpack.c.l.b16 %v1185
        %v1205 = vunpack.c.l.b16 %v1189
        %v1206 = vunpack.c.l.b16 %v1193
        %v1207 = vunpack.c.l.b16 %v1197
        %v1208 = vpack.c.b16 %v1201, %v1200
        %v1209 = vpack.c.b16 %v1203, %v1202
        %v1210 = vpack.c.b16 %v1205, %v1204
        %v1211 = vpack.c.b16 %v1207, %v1206
        %v1214 = vunpack.c.l.b16 %v1198
        %v1215 = vunpack.c.l.b16 %v1199
        %v1216 = vpack.c.b16 %v1215, %v1214
        %v1219 = vsel %vm623, %v1208, 0
        %v1222 = vsel %vm623, %v1209, 0
        %v1225 = vsel %vm623, %v1210, 0
        %v1228 = vsel %vm623, %v1211, 0
        %1230 = vmatpush.bf16.msra.mxu0 0
        %1231 = vmatpush.bf16.msra.mxu0 0
        %1232 = vmatpush.bf16.msra.mxu0 0
        %1233 = vmatpush.bf16.msra.mxu0 0
        %1234 = vmatpush.bf16.msra.mxu0 0
        %1235 = vmatpush.bf16.msra.mxu0 0
        %1236 = vmatpush.bf16.msra.mxu0 0
        %1237 = vmatpush.bf16.msra.mxu0 %v1216
        %1238 = vmatmul.bf16.gmra.mxu0 %v1219
        %v1239 = vpop.f32.mrf.mxu0
        %v1240 = vadd.f32 0.0, %v1239
        %v1241 = vpop.f32.mrf.mxu0
        %v1242 = vadd.f32 0.0, %v1241
        %1243 = vmatmul.bf16.gmra.mxu0 %v1222
        %v1244 = vpop.f32.mrf.mxu0
        %v1245 = vadd.f32 0.0, %v1244
        %v1246 = vpop.f32.mrf.mxu0
        %v1247 = vadd.f32 0.0, %v1246
        %1248 = vmatmul.bf16.gmra.mxu0 %v1225
        %v1249 = vpop.f32.mrf.mxu0
        %v1250 = vadd.f32 0.0, %v1249
        %v1251 = vpop.f32.mrf.mxu0
        %v1252 = vadd.f32 0.0, %v1251
        %1253 = vmatmul.bf16.gmra.mxu0 %v1228
        %v1254 = vpop.f32.mrf.mxu0
        %v1255 = vadd.f32 0.0, %v1254
        %v1256 = vpop.f32.mrf.mxu0
        %v1257 = vadd.f32 0.0, %v1256
        %1258 = vdwg.mxu0
        %v1259 = vadd.f32 %v1134, %v1240
        %v1260 = vadd.f32 %v1135, %v1242
        %v1261 = vadd.f32 %v1136, %v1245
        %v1262 = vadd.f32 %v1137, %v1247
        %v1263 = vadd.f32 %v1138, %v1250
        %v1264 = vadd.f32 %v1139, %v1252
        %v1265 = vadd.f32 %v1140, %v1255
        %v1266 = vadd.f32 %v1141, %v1257
        %s1267 = scalar_lea.vmem [#allocation2], 16
        %v1268 = vld [vmem:[%s1267] sm:$0xf]
        %v1269 = vld [vmem:[%s1267 + $0x8] sm:$0xf]
        %v1270 = vld [vmem:[%s1267 + $0x10] sm:$0xf]
        %v1271 = vld [vmem:[%s1267 + $0x18] sm:$0xf]
        %v1272 = vld [vmem:[%s1267 + $0x20] sm:$0xf]
        %v1273 = vld [vmem:[%s1267 + $0x28] sm:$0xf]
        %v1274 = vld [vmem:[%s1267 + $0x30] sm:$0xf]
        %v1275 = vld [vmem:[%s1267 + $0x38] sm:$0xf]
        %v1276 = vld [vmem:[%s1 + $0x30] sm:$0xf]
        %v1277 = vld [vmem:[%s1 + $0x34] sm:$0xf]
        %v1286 = vunpack.c.l.b16 %v1268
        %v1287 = vunpack.c.l.b16 %v1269
        %v1288 = vunpack.c.l.b16 %v1270
        %v1289 = vunpack.c.l.b16 %v1271
        %v1290 = vunpack.c.l.b16 %v1272
        %v1291 = vunpack.c.l.b16 %v1273
        %v1292 = vunpack.c.l.b16 %v1274
        %v1293 = vunpack.c.l.b16 %v1275
        %v1294 = vpack.c.b16 %v1287, %v1286
        %v1295 = vpack.c.b16 %v1289, %v1288
        %v1296 = vpack.c.b16 %v1291, %v1290
        %v1297 = vpack.c.b16 %v1293, %v1292
        %v1300 = vunpack.c.l.b16 %v1276
        %v1301 = vunpack.c.l.b16 %v1277
        %v1302 = vpack.c.b16 %v1301, %v1300
        %v1305 = vsel %vm623, %v1294, 0
        %v1308 = vsel %vm623, %v1295, 0
        %v1311 = vsel %vm623, %v1296, 0
        %v1314 = vsel %vm623, %v1297, 0
        %1316 = vmatpush.bf16.msra.mxu0 0
        %1317 = vmatpush.bf16.msra.mxu0 0
        %1318 = vmatpush.bf16.msra.mxu0 0
        %1319 = vmatpush.bf16.msra.mxu0 0
        %1320 = vmatpush.bf16.msra.mxu0 0
        %1321 = vmatpush.bf16.msra.mxu0 0
        %1322 = vmatpush.bf16.msra.mxu0 0
        %1323 = vmatpush.bf16.msra.mxu0 %v1302
        %1324 = vmatmul.bf16.gmra.mxu0 %v1305
        %v1325 = vpop.f32.mrf.mxu0
        %v1326 = vadd.f32 0.0, %v1325
        %v1327 = vpop.f32.mrf.mxu0
        %v1328 = vadd.f32 0.0, %v1327
        %1329 = vmatmul.bf16.gmra.mxu0 %v1308
        %v1330 = vpop.f32.mrf.mxu0
        %v1331 = vadd.f32 0.0, %v1330
        %v1332 = vpop.f32.mrf.mxu0
        %v1333 = vadd.f32 0.0, %v1332
        %1334 = vmatmul.bf16.gmra.mxu0 %v1311
        %v1335 = vpop.f32.mrf.mxu0
        %v1336 = vadd.f32 0.0, %v1335
        %v1337 = vpop.f32.mrf.mxu0
        %v1338 = vadd.f32 0.0, %v1337
        %1339 = vmatmul.bf16.gmra.mxu0 %v1314
        %v1340 = vpop.f32.mrf.mxu0
        %v1341 = vadd.f32 0.0, %v1340
        %v1342 = vpop.f32.mrf.mxu0
        %v1343 = vadd.f32 0.0, %v1342
        %1344 = vdwg.mxu0
        %v1345 = vadd.f32 %v1259, %v1326
        %v1346 = vadd.f32 %v1260, %v1328
        %v1347 = vadd.f32 %v1261, %v1331
        %v1348 = vadd.f32 %v1262, %v1333
        %v1349 = vadd.f32 %v1263, %v1336
        %v1350 = vadd.f32 %v1264, %v1338
        %v1351 = vadd.f32 %v1265, %v1341
        %v1352 = vadd.f32 %v1266, %v1343
        %v1353 = vld [vmem:[%s1267] sm:$0xf]
        %v1354 = vld [vmem:[%s1267 + $0x4] sm:$0x1]
        %v1355 = vld [vmem:[%s1267 + $0x8] sm:$0xf]
        %v1356 = vld [vmem:[%s1267 + $0xc] sm:$0x1]
        %v1357 = vld [vmem:[%s1267 + $0x10] sm:$0xf]
        %v1358 = vld [vmem:[%s1267 + $0x14] sm:$0x1]
        %v1359 = vld [vmem:[%s1267 + $0x18] sm:$0xf]
        %v1360 = vld [vmem:[%s1267 + $0x1c] sm:$0x1]
        %v1361 = vld [vmem:[%s1267 + $0x20] sm:$0xf]
        %v1362 = vld [vmem:[%s1267 + $0x24] sm:$0x1]
        %v1363 = vld [vmem:[%s1267 + $0x28] sm:$0xf]
        %v1364 = vld [vmem:[%s1267 + $0x2c] sm:$0x1]
        %v1365 = vld [vmem:[%s1267 + $0x30] sm:$0xf]
        %v1366 = vld [vmem:[%s1267 + $0x34] sm:$0x1]
        %v1367 = vld [vmem:[%s1267 + $0x38] sm:$0xf]
        %v1368 = vld [vmem:[%s1267 + $0x3c] sm:$0x1]
        %v1370 = vshrl.u32 %v1353, 16
        %v1372 = vrot.slane %v1370, 4
        %v1373 = vshll.u32 %v1353, 16
        %v1375 = vrot.slane %v1373, 5
        %v1376 = vor.u32 %v1372, %v1375
        %v1377 = vrot.slane %v1376, 4
        %v1379 = vshll.u32 %v1354, 16
        %v1381 = vrot.slane %v1379, 5
        %v1382 = vsel %vm490, %v1377, %v1381
        %v1384 = vshrl.u32 %v1355, 16
        %v1386 = vrot.slane %v1384, 4
        %v1387 = vshll.u32 %v1355, 16
        %v1389 = vrot.slane %v1387, 5
        %v1390 = vor.u32 %v1386, %v1389
        %v1391 = vrot.slane %v1390, 4
        %v1393 = vshll.u32 %v1356, 16
        %v1395 = vrot.slane %v1393, 5
        %v1396 = vsel %vm490, %v1391, %v1395
        %v1398 = vshrl.u32 %v1357, 16
        %v1400 = vrot.slane %v1398, 4
        %v1401 = vshll.u32 %v1357, 16
        %v1403 = vrot.slane %v1401, 5
        %v1404 = vor.u32 %v1400, %v1403
        %v1405 = vrot.slane %v1404, 4
        %v1407 = vshll.u32 %v1358, 16
        %v1409 = vrot.slane %v1407, 5
        %v1410 = vsel %vm490, %v1405, %v1409
        %v1412 = vshrl.u32 %v1359, 16
        %v1414 = vrot.slane %v1412, 4
        %v1415 = vshll.u32 %v1359, 16
        %v1417 = vrot.slane %v1415, 5
        %v1418 = vor.u32 %v1414, %v1417
        %v1419 = vrot.slane %v1418, 4
        %v1421 = vshll.u32 %v1360, 16
        %v1423 = vrot.slane %v1421, 5
        %v1424 = vsel %vm490, %v1419, %v1423
        %v1426 = vshrl.u32 %v1361, 16
        %v1428 = vrot.slane %v1426, 4
        %v1429 = vshll.u32 %v1361, 16
        %v1431 = vrot.slane %v1429, 5
        %v1432 = vor.u32 %v1428, %v1431
        %v1433 = vrot.slane %v1432, 4
        %v1435 = vshll.u32 %v1362, 16
        %v1437 = vrot.slane %v1435, 5
        %v1438 = vsel %vm490, %v1433, %v1437
        %v1440 = vshrl.u32 %v1363, 16
        %v1442 = vrot.slane %v1440, 4
        %v1443 = vshll.u32 %v1363, 16
        %v1445 = vrot.slane %v1443, 5
        %v1446 = vor.u32 %v1442, %v1445
        %v1447 = vrot.slane %v1446, 4
        %v1449 = vshll.u32 %v1364, 16
        %v1451 = vrot.slane %v1449, 5
        %v1452 = vsel %vm490, %v1447, %v1451
        %v1454 = vshrl.u32 %v1365, 16
        %v1456 = vrot.slane %v1454, 4
        %v1457 = vshll.u32 %v1365, 16
        %v1459 = vrot.slane %v1457, 5
        %v1460 = vor.u32 %v1456, %v1459
        %v1461 = vrot.slane %v1460, 4
        %v1463 = vshll.u32 %v1366, 16
        %v1465 = vrot.slane %v1463, 5
        %v1466 = vsel %vm490, %v1461, %v1465
        %v1468 = vshrl.u32 %v1367, 16
        %v1470 = vrot.slane %v1468, 4
        %v1471 = vshll.u32 %v1367, 16
        %v1473 = vrot.slane %v1471, 5
        %v1474 = vor.u32 %v1470, %v1473
        %v1475 = vrot.slane %v1474, 4
        %v1477 = vshll.u32 %v1368, 16
        %v1479 = vrot.slane %v1477, 5
        %v1480 = vsel %vm490, %v1475, %v1479
        %v1481 = vld [vmem:[%s1 + $0x38] sm:$0xf]
        %v1482 = vld [vmem:[%s1 + $0x3c] sm:$0xf]
        %v1483 = vunpack.c.l.b16 %v1382
        %v1484 = vunpack.c.l.b16 %v1396
        %v1485 = vunpack.c.l.b16 %v1410
        %v1486 = vunpack.c.l.b16 %v1424
        %v1487 = vunpack.c.l.b16 %v1438
        %v1488 = vunpack.c.l.b16 %v1452
        %v1489 = vunpack.c.l.b16 %v1466
        %v1490 = vunpack.c.l.b16 %v1480
        %v1491 = vpack.c.b16 %v1484, %v1483
        %v1492 = vpack.c.b16 %v1486, %v1485
        %v1493 = vpack.c.b16 %v1488, %v1487
        %v1494 = vpack.c.b16 %v1490, %v1489
        %v1497 = vunpack.c.l.b16 %v1481
        %v1498 = vunpack.c.l.b16 %v1482
        %v1499 = vpack.c.b16 %v1498, %v1497
        %v1502 = vsel %vm623, %v1491, 0
        %v1505 = vsel %vm623, %v1492, 0
        %v1508 = vsel %vm623, %v1493, 0
        %v1511 = vsel %vm623, %v1494, 0
        %1513 = vmatpush.bf16.msra.mxu0 0
        %1514 = vmatpush.bf16.msra.mxu0 0
        %1515 = vmatpush.bf16.msra.mxu0 0
        %1516 = vmatpush.bf16.msra.mxu0 0
        %1517 = vmatpush.bf16.msra.mxu0 0
        %1518 = vmatpush.bf16.msra.mxu0 0
        %1519 = vmatpush.bf16.msra.mxu0 0
        %1520 = vmatpush.bf16.msra.mxu0 %v1499
        %1521 = vmatmul.bf16.gmra.mxu0 %v1502
        %v1522 = vpop.f32.mrf.mxu0
        %v1523 = vadd.f32 0.0, %v1522
        %v1524 = vpop.f32.mrf.mxu0
        %v1525 = vadd.f32 0.0, %v1524
        %1526 = vmatmul.bf16.gmra.mxu0 %v1505
        %v1527 = vpop.f32.mrf.mxu0
        %v1528 = vadd.f32 0.0, %v1527
        %v1529 = vpop.f32.mrf.mxu0
        %v1530 = vadd.f32 0.0, %v1529
        %1531 = vmatmul.bf16.gmra.mxu0 %v1508
        %v1532 = vpop.f32.mrf.mxu0
        %v1533 = vadd.f32 0.0, %v1532
        %v1534 = vpop.f32.mrf.mxu0
        %v1535 = vadd.f32 0.0, %v1534
        %1536 = vmatmul.bf16.gmra.mxu0 %v1511
        %v1537 = vpop.f32.mrf.mxu0
        %v1538 = vadd.f32 0.0, %v1537
        %v1539 = vpop.f32.mrf.mxu0
        %v1540 = vadd.f32 0.0, %v1539
        %1541 = vdwg.mxu0
        %v1542 = vadd.f32 %v1345, %v1523
        %v1543 = vadd.f32 %v1346, %v1525
        %v1544 = vadd.f32 %v1347, %v1528
        %v1545 = vadd.f32 %v1348, %v1530
        %v1546 = vadd.f32 %v1349, %v1533
        %v1547 = vadd.f32 %v1350, %v1535
        %v1548 = vadd.f32 %v1351, %v1538
        %v1549 = vadd.f32 %v1352, %v1540
        %v1550 = vld [vmem:[%s1267] sm:$0xe]
        %v1551 = vld [vmem:[%s1267 + $0x8] sm:$0xe]
        %v1552 = vld [vmem:[%s1267 + $0x10] sm:$0xe]
        %v1553 = vld [vmem:[%s1267 + $0x18] sm:$0xe]
        %v1554 = vld [vmem:[%s1267 + $0x20] sm:$0xe]
        %v1555 = vld [vmem:[%s1267 + $0x28] sm:$0xe]
        %v1556 = vld [vmem:[%s1267 + $0x30] sm:$0xe]
        %v1557 = vld [vmem:[%s1267 + $0x38] sm:$0xe]
        %v1574 = vrot.slane %v1550, 5
        %v1575 = vrot.slane %v1574, 4
        %v1576 = vrot.slane %v1354, 5
        %v1577 = vsel %vm758, %v1575, %v1576
        %v1578 = vrot.slane %v1551, 5
        %v1579 = vrot.slane %v1578, 4
        %v1580 = vrot.slane %v1356, 5
        %v1581 = vsel %vm758, %v1579, %v1580
        %v1582 = vrot.slane %v1552, 5
        %v1583 = vrot.slane %v1582, 4
        %v1584 = vrot.slane %v1358, 5
        %v1585 = vsel %vm758, %v1583, %v1584
        %v1586 = vrot.slane %v1553, 5
        %v1587 = vrot.slane %v1586, 4
        %v1588 = vrot.slane %v1360, 5
        %v1589 = vsel %vm758, %v1587, %v1588
        %v1590 = vrot.slane %v1554, 5
        %v1591 = vrot.slane %v1590, 4
        %v1592 = vrot.slane %v1362, 5
        %v1593 = vsel %vm758, %v1591, %v1592
        %v1594 = vrot.slane %v1555, 5
        %v1595 = vrot.slane %v1594, 4
        %v1596 = vrot.slane %v1364, 5
        %v1597 = vsel %vm758, %v1595, %v1596
        %v1598 = vrot.slane %v1556, 5
        %v1599 = vrot.slane %v1598, 4
        %v1600 = vrot.slane %v1366, 5
        %v1601 = vsel %vm758, %v1599, %v1600
        %v1602 = vrot.slane %v1557, 5
        %v1603 = vrot.slane %v1602, 4
        %v1604 = vrot.slane %v1368, 5
        %v1605 = vsel %vm758, %v1603, %v1604
        %v1606 = vld [vmem:[%s1 + $0x40] sm:$0xf]
        %v1607 = vld [vmem:[%s1 + $0x44] sm:$0xf]
        %v1608 = vunpack.c.l.b16 %v1577
        %v1609 = vunpack.c.l.b16 %v1581
        %v1610 = vunpack.c.l.b16 %v1585
        %v1611 = vunpack.c.l.b16 %v1589
        %v1612 = vunpack.c.l.b16 %v1593
        %v1613 = vunpack.c.l.b16 %v1597
        %v1614 = vunpack.c.l.b16 %v1601
        %v1615 = vunpack.c.l.b16 %v1605
        %v1616 = vpack.c.b16 %v1609, %v1608
        %v1617 = vpack.c.b16 %v1611, %v1610
        %v1618 = vpack.c.b16 %v1613, %v1612
        %v1619 = vpack.c.b16 %v1615, %v1614
        %v1622 = vunpack.c.l.b16 %v1606
        %v1623 = vunpack.c.l.b16 %v1607
        %v1624 = vpack.c.b16 %v1623, %v1622
        %v1627 = vsel %vm623, %v1616, 0
        %v1630 = vsel %vm623, %v1617, 0
        %v1633 = vsel %vm623, %v1618, 0
        %v1636 = vsel %vm623, %v1619, 0
        %1638 = vmatpush.bf16.msra.mxu0 0
        %1639 = vmatpush.bf16.msra.mxu0 0
        %1640 = vmatpush.bf16.msra.mxu0 0
        %1641 = vmatpush.bf16.msra.mxu0 0
        %1642 = vmatpush.bf16.msra.mxu0 0
        %1643 = vmatpush.bf16.msra.mxu0 0
        %1644 = vmatpush.bf16.msra.mxu0 0
        %1645 = vmatpush.bf16.msra.mxu0 %v1624
        %1646 = vmatmul.bf16.gmra.mxu0 %v1627
        %v1647 = vpop.f32.mrf.mxu0
        %v1648 = vadd.f32 0.0, %v1647
        %v1649 = vpop.f32.mrf.mxu0
        %v1650 = vadd.f32 0.0, %v1649
        %1651 = vmatmul.bf16.gmra.mxu0 %v1630
        %v1652 = vpop.f32.mrf.mxu0
        %v1653 = vadd.f32 0.0, %v1652
        %v1654 = vpop.f32.mrf.mxu0
        %v1655 = vadd.f32 0.0, %v1654
        %1656 = vmatmul.bf16.gmra.mxu0 %v1633
        %v1657 = vpop.f32.mrf.mxu0
        %v1658 = vadd.f32 0.0, %v1657
        %v1659 = vpop.f32.mrf.mxu0
        %v1660 = vadd.f32 0.0, %v1659
        %1661 = vmatmul.bf16.gmra.mxu0 %v1636
        %v1662 = vpop.f32.mrf.mxu0
        %v1663 = vadd.f32 0.0, %v1662
        %v1664 = vpop.f32.mrf.mxu0
        %v1665 = vadd.f32 0.0, %v1664
        %1666 = vdwg.mxu0
        %v1667 = vadd.f32 %v1542, %v1648
        %v1668 = vadd.f32 %v1543, %v1650
        %v1669 = vadd.f32 %v1544, %v1653
        %v1670 = vadd.f32 %v1545, %v1655
        %v1671 = vadd.f32 %v1546, %v1658
        %v1672 = vadd.f32 %v1547, %v1660
        %v1673 = vadd.f32 %v1548, %v1663
        %v1674 = vadd.f32 %v1549, %v1665
        %v1675 = vld [vmem:[%s2] sm:$0x1]
        %v1677 = vperm.slane %v1675, 0
        %v1679 = vmul.f32 %v1667, %v1677
        %v1680 = vmul.f32 %v1668, %v1677
        %v1681 = vmul.f32 %v1669, %v1677
        %v1682 = vmul.f32 %v1670, %v1677
        %v1683 = vmul.f32 %v1671, %v1677
        %v1684 = vmul.f32 %v1672, %v1677
        %v1685 = vmul.f32 %v1673, %v1677
        %v1686 = vmul.f32 %v1674, %v1677
        %v1687 = vld [vmem:[%s3] sm:$0x1]
        %v1689 = vperm.slane %v1687, 0
        %v1691 = vadd.f32 %v1679, %v1689
        %v1692 = vadd.f32 %v1680, %v1689
        %v1693 = vadd.f32 %v1681, %v1689
        %v1694 = vadd.f32 %v1682, %v1689
        %v1695 = vadd.f32 %v1683, %v1689
        %v1696 = vadd.f32 %v1684, %v1689
        %v1697 = vadd.f32 %v1685, %v1689
        %v1698 = vadd.f32 %v1686, %v1689
        %v1699 = vmax.f32 %v1691, 0.0
        %v1700 = vmax.f32 %v1692, 0.0
        %v1701 = vmax.f32 %v1693, 0.0
        %v1702 = vmax.f32 %v1694, 0.0
        %v1703 = vmax.f32 %v1695, 0.0
        %v1704 = vmax.f32 %v1696, 0.0
        %v1705 = vmax.f32 %v1697, 0.0
        %v1706 = vmax.f32 %v1698, 0.0
        %v1707 = vpack.c.bf16 %v1699, %v1699
        %v1708 = vpack.c.bf16 %v1700, %v1700
        %v1709 = vpack.c.bf16 %v1701, %v1701
        %v1710 = vpack.c.bf16 %v1702, %v1702
        %v1711 = vpack.c.bf16 %v1703, %v1703
        %v1712 = vpack.c.bf16 %v1704, %v1704
        %v1713 = vpack.c.bf16 %v1705, %v1705
        %v1714 = vpack.c.bf16 %v1706, %v1706
        %1715 = vst.msk [vmem:[%s237] sm:$0xf] %vm254, %v1707
        %1716 = vst.msk [vmem:[%s237 + $0x4] sm:$0xf] %vm254, %v1708
        %1717 = vst.msk [vmem:[%s237 + $0x8] sm:$0xf] %vm254, %v1709
        %1718 = vst.msk [vmem:[%s237 + $0xc] sm:$0xf] %vm254, %v1710
        %1719 = vst.msk [vmem:[%s237 + $0x10] sm:$0xf] %vm254, %v1711
        %1720 = vst.msk [vmem:[%s237 + $0x14] sm:$0xf] %vm254, %v1712
        %1721 = vst.msk [vmem:[%s237 + $0x18] sm:$0xf] %vm254, %v1713
        %1722 = vst.msk [vmem:[%s237 + $0x1c] sm:$0xf] %vm254, %v1714
        %v1723 = vsel %vm623, %v1699, -inf
        %v1724 = vsel %vm623, %v1700, -inf
        %v1725 = vmax.f32 %v1723, %v1724
        %v1726 = vsel %vm623, %v1701, -inf
        %v1727 = vsel %vm623, %v1702, -inf
        %v1728 = vmax.f32 %v1726, %v1727
        %v1729 = vsel %vm623, %v1703, -inf
        %v1730 = vsel %vm623, %v1704, -inf
        %v1731 = vmax.f32 %v1729, %v1730
        %v1732 = vsel %vm623, %v1705, -inf
        %v1733 = vsel %vm623, %v1706, -inf
        %v1734 = vmax.f32 %v1732, %v1733
        %v1739 = vrot.slane %v1725, 2
        %v1740 = vrot.slane %v1725, 4
        %v1741 = vrot.slane %v1725, 6
        %v1742 = vrot.slane %v1728, 2
        %v1743 = vrot.slane %v1728, 4
        %v1744 = vrot.slane %v1728, 6
        %v1745 = vrot.slane %v1731, 2
        %v1746 = vrot.slane %v1731, 4
        %v1747 = vrot.slane %v1731, 6
        %v1748 = vrot.slane %v1734, 2
        %v1749 = vrot.slane %v1734, 4
        %v1750 = vrot.slane %v1734, 6
        %vm1763 = vcmask 123904
        %v1764 = vsel %vm1763, %v1725, -inf
        %v1765 = vrot.slane %v1764, 4
        %v1766 = vmax.f32 %v1764, %v1765
        %v1767 = vrot.slane %v1766, 2
        %v1768 = vmax.f32 %v1766, %v1767
        %v1769 = vrot.slane %v1768, 1
        %v1770 = vmax.f32 %v1768, %v1769
        %v1771 = vsel %vm1763, %v1739, -inf
        %v1772 = vrot.slane %v1771, 4
        %v1773 = vmax.f32 %v1771, %v1772
        %v1774 = vrot.slane %v1773, 2
        %v1775 = vmax.f32 %v1773, %v1774
        %v1776 = vrot.slane %v1775, 1
        %v1777 = vmax.f32 %v1775, %v1776
        %v1778 = vsel %vm1763, %v1740, -inf
        %v1779 = vrot.slane %v1778, 4
        %v1780 = vmax.f32 %v1778, %v1779
        %v1781 = vrot.slane %v1780, 2
        %v1782 = vmax.f32 %v1780, %v1781
        %v1783 = vrot.slane %v1782, 1
        %v1784 = vmax.f32 %v1782, %v1783
        %v1785 = vsel %vm1763, %v1741, -inf
        %v1786 = vrot.slane %v1785, 4
        %v1787 = vmax.f32 %v1785, %v1786
        %v1788 = vrot.slane %v1787, 2
        %v1789 = vmax.f32 %v1787, %v1788
        %v1790 = vrot.slane %v1789, 1
        %v1791 = vmax.f32 %v1789, %v1790
        %v1792 = vsel %vm1763, %v1728, -inf
        %v1793 = vrot.slane %v1792, 4
        %v1794 = vmax.f32 %v1792, %v1793
        %v1795 = vrot.slane %v1794, 2
        %v1796 = vmax.f32 %v1794, %v1795
        %v1797 = vrot.slane %v1796, 1
        %v1798 = vmax.f32 %v1796, %v1797
        %v1799 = vsel %vm1763, %v1742, -inf
        %v1800 = vrot.slane %v1799, 4
        %v1801 = vmax.f32 %v1799, %v1800
        %v1802 = vrot.slane %v1801, 2
        %v1803 = vmax.f32 %v1801, %v1802
        %v1804 = vrot.slane %v1803, 1
        %v1805 = vmax.f32 %v1803, %v1804
        %v1806 = vsel %vm1763, %v1743, -inf
        %v1807 = vrot.slane %v1806, 4
        %v1808 = vmax.f32 %v1806, %v1807
        %v1809 = vrot.slane %v1808, 2
        %v1810 = vmax.f32 %v1808, %v1809
        %v1811 = vrot.slane %v1810, 1
        %v1812 = vmax.f32 %v1810, %v1811
        %v1813 = vsel %vm1763, %v1744, -inf
        %v1814 = vrot.slane %v1813, 4
        %v1815 = vmax.f32 %v1813, %v1814
        %v1816 = vrot.slane %v1815, 2
        %v1817 = vmax.f32 %v1815, %v1816
        %v1818 = vrot.slane %v1817, 1
        %v1819 = vmax.f32 %v1817, %v1818
        %v1820 = vsel %vm1763, %v1731, -inf
        %v1821 = vrot.slane %v1820, 4
        %v1822 = vmax.f32 %v1820, %v1821
        %v1823 = vrot.slane %v1822, 2
        %v1824 = vmax.f32 %v1822, %v1823
        %v1825 = vrot.slane %v1824, 1
        %v1826 = vmax.f32 %v1824, %v1825
        %v1827 = vsel %vm1763, %v1745, -inf
        %v1828 = vrot.slane %v1827, 4
        %v1829 = vmax.f32 %v1827, %v1828
        %v1830 = vrot.slane %v1829, 2
        %v1831 = vmax.f32 %v1829, %v1830
        %v1832 = vrot.slane %v1831, 1
        %v1833 = vmax.f32 %v1831, %v1832
        %v1834 = vsel %vm1763, %v1746, -inf
        %v1835 = vrot.slane %v1834, 4
        %v1836 = vmax.f32 %v1834, %v1835
        %v1837 = vrot.slane %v1836, 2
        %v1838 = vmax.f32 %v1836, %v1837
        %v1839 = vrot.slane %v1838, 1
        %v1840 = vmax.f32 %v1838, %v1839
        %v1841 = vsel %vm1763, %v1747, -inf
        %v1842 = vrot.slane %v1841, 4
        %v1843 = vmax.f32 %v1841, %v1842
        %v1844 = vrot.slane %v1843, 2
        %v1845 = vmax.f32 %v1843, %v1844
        %v1846 = vrot.slane %v1845, 1
        %v1847 = vmax.f32 %v1845, %v1846
        %v1848 = vsel %vm1763, %v1734, -inf
        %v1849 = vrot.slane %v1848, 4
        %v1850 = vmax.f32 %v1848, %v1849
        %v1851 = vrot.slane %v1850, 2
        %v1852 = vmax.f32 %v1850, %v1851
        %v1853 = vrot.slane %v1852, 1
        %v1854 = vmax.f32 %v1852, %v1853
        %v1855 = vsel %vm1763, %v1748, -inf
        %v1856 = vrot.slane %v1855, 4
        %v1857 = vmax.f32 %v1855, %v1856
        %v1858 = vrot.slane %v1857, 2
        %v1859 = vmax.f32 %v1857, %v1858
        %v1860 = vrot.slane %v1859, 1
        %v1861 = vmax.f32 %v1859, %v1860
        %v1862 = vsel %vm1763, %v1749, -inf
        %v1863 = vrot.slane %v1862, 4
        %v1864 = vmax.f32 %v1862, %v1863
        %v1865 = vrot.slane %v1864, 2
        %v1866 = vmax.f32 %v1864, %v1865
        %v1867 = vrot.slane %v1866, 1
        %v1868 = vmax.f32 %v1866, %v1867
        %v1869 = vsel %vm1763, %v1750, -inf
        %v1870 = vrot.slane %v1869, 4
        %v1871 = vmax.f32 %v1869, %v1870
        %v1872 = vrot.slane %v1871, 2
        %v1873 = vmax.f32 %v1871, %v1872
        %v1874 = vrot.slane %v1873, 1
        %v1875 = vmax.f32 %v1873, %v1874
        %v1876 = vpack.c.bf16 %v1770, %v1770
        %v1877 = vpack.c.bf16 %v1777, %v1777
        %v1878 = vpack.c.bf16 %v1784, %v1784
        %v1879 = vpack.c.bf16 %v1791, %v1791
        %v1880 = vpack.c.bf16 %v1798, %v1798
        %v1881 = vpack.c.bf16 %v1805, %v1805
        %v1882 = vpack.c.bf16 %v1812, %v1812
        %v1883 = vpack.c.bf16 %v1819, %v1819
        %v1884 = vpack.c.bf16 %v1826, %v1826
        %v1885 = vpack.c.bf16 %v1833, %v1833
        %v1886 = vpack.c.bf16 %v1840, %v1840
        %v1887 = vpack.c.bf16 %v1847, %v1847
        %v1888 = vpack.c.bf16 %v1854, %v1854
        %v1889 = vpack.c.bf16 %v1861, %v1861
        %v1890 = vpack.c.bf16 %v1868, %v1868
        %v1891 = vpack.c.bf16 %v1875, %v1875
        %v1908 = vrot.slane %v1876, 2
        %v1909 = vrot.slane %v1877, 2
        %v1910 = vrot.slane %v1878, 2
        %v1911 = vrot.slane %v1879, 2
        %v1912 = vrot.slane %v1880, 2
        %v1913 = vrot.slane %v1881, 2
        %v1914 = vrot.slane %v1882, 2
        %v1915 = vrot.slane %v1883, 2
        %v1916 = vrot.slane %v1884, 2
        %v1917 = vrot.slane %v1885, 2
        %v1918 = vrot.slane %v1886, 2
        %v1919 = vrot.slane %v1887, 2
        %v1920 = vrot.slane %v1888, 2
        %v1921 = vrot.slane %v1889, 2
        %v1922 = vrot.slane %v1890, 2
        %v1923 = vrot.slane %v1891, 2
        %vm1924 = vcmask 1041408
        %v1927 = vsel %vm1924, %v1876, %v1908
        %v1930 = vsel %vm1924, %v1877, %v1909
        %v1933 = vsel %vm1924, %v1878, %v1910
        %v1936 = vsel %vm1924, %v1879, %v1911
        %v1939 = vsel %vm1924, %v1880, %v1912
        %v1942 = vsel %vm1924, %v1881, %v1913
        %v1945 = vsel %vm1924, %v1882, %v1914
        %v1948 = vsel %vm1924, %v1883, %v1915
        %v1951 = vsel %vm1924, %v1884, %v1916
        %v1954 = vsel %vm1924, %v1885, %v1917
        %v1957 = vsel %vm1924, %v1886, %v1918
        %v1960 = vsel %vm1924, %v1887, %v1919
        %v1963 = vsel %vm1924, %v1888, %v1920
        %v1966 = vsel %vm1924, %v1889, %v1921
        %v1969 = vsel %vm1924, %v1890, %v1922
        %v1972 = vsel %vm1924, %v1891, %v1923
        %1973 = vst [vmem:[#allocation1] ss:$2 sm:$0xff] %v1927
        %v1974 = vld.sshfl [vmem:[#allocation1] sm:$0xff pattern:$0x75643120]
        %s1976 = scalar_lea.vmem [#allocation1], 16
        %1977 = vst [vmem:[%s1976] ss:$2 sm:$0xff] %v1930
        %v1978 = vld.sshfl [vmem:[#allocation1 + $0x10] sm:$0xff pattern:$0x75643120]
        %s1980 = scalar_lea.vmem [#allocation1], 32
        %1981 = vst [vmem:[%s1980] ss:$2 sm:$0xff] %v1933
        %v1982 = vld.sshfl [vmem:[#allocation1 + $0x20] sm:$0xff pattern:$0x75643120]
        %s1984 = scalar_lea.vmem [#allocation1], 48
        %1985 = vst [vmem:[%s1984] ss:$2 sm:$0xff] %v1936
        %v1986 = vld.sshfl [vmem:[#allocation1 + $0x30] sm:$0xff pattern:$0x75643120]
        %1988 = vst [vmem:[#allocation1] ss:$2 sm:$0xff] %v1939
        %v1989 = vld.sshfl [vmem:[#allocation1] sm:$0xff pattern:$0x75643120]
        %1991 = vst [vmem:[%s1976] ss:$2 sm:$0xff] %v1942
        %v1992 = vld.sshfl [vmem:[#allocation1 + $0x10] sm:$0xff pattern:$0x75643120]
        %1994 = vst [vmem:[%s1980] ss:$2 sm:$0xff] %v1945
        %v1995 = vld.sshfl [vmem:[#allocation1 + $0x20] sm:$0xff pattern:$0x75643120]
        %1997 = vst [vmem:[%s1984] ss:$2 sm:$0xff] %v1948
        %v1998 = vld.sshfl [vmem:[#allocation1 + $0x30] sm:$0xff pattern:$0x75643120]
        %2000 = vst [vmem:[#allocation1] ss:$2 sm:$0xff] %v1951
        %v2001 = vld.sshfl [vmem:[#allocation1] sm:$0xff pattern:$0x75643120]
        %2003 = vst [vmem:[%s1976] ss:$2 sm:$0xff] %v1954
        %v2004 = vld.sshfl [vmem:[#allocation1 + $0x10] sm:$0xff pattern:$0x75643120]
        %2006 = vst [vmem:[%s1980] ss:$2 sm:$0xff] %v1957
        %v2007 = vld.sshfl [vmem:[#allocation1 + $0x20] sm:$0xff pattern:$0x75643120]
        %2009 = vst [vmem:[%s1984] ss:$2 sm:$0xff] %v1960
        %v2010 = vld.sshfl [vmem:[#allocation1 + $0x30] sm:$0xff pattern:$0x75643120]
        %2012 = vst [vmem:[#allocation1] ss:$2 sm:$0xff] %v1963
        %v2013 = vld.sshfl [vmem:[#allocation1] sm:$0xff pattern:$0x75643120]
        %2015 = vst [vmem:[%s1976] ss:$2 sm:$0xff] %v1966
        %v2016 = vld.sshfl [vmem:[#allocation1 + $0x10] sm:$0xff pattern:$0x75643120]
        %2018 = vst [vmem:[%s1980] ss:$2 sm:$0xff] %v1969
        %v2019 = vld.sshfl [vmem:[#allocation1 + $0x20] sm:$0xff pattern:$0x75643120]
        %2021 = vst [vmem:[%s1984] ss:$2 sm:$0xff] %v1972
        %v2022 = vld.sshfl [vmem:[#allocation1 + $0x30] sm:$0xff pattern:$0x75643120]
        %v2024 = vunpack.c.l.b16 %v1974
        %v2025 = vunpack.c.l.b16 %v1978
        %v2026 = vunpack.c.l.b16 %v1982
        %v2027 = vunpack.c.l.b16 %v1986
        %v2028 = vunpack.c.l.b16 %v1989
        %v2029 = vunpack.c.l.b16 %v1992
        %v2030 = vunpack.c.l.b16 %v1995
        %v2031 = vunpack.c.l.b16 %v1998
        %v2032 = vunpack.c.l.b16 %v2001
        %v2033 = vunpack.c.l.b16 %v2004
        %v2034 = vunpack.c.l.b16 %v2007
        %v2035 = vunpack.c.l.b16 %v2010
        %v2036 = vunpack.c.l.b16 %v2013
        %v2037 = vunpack.c.l.b16 %v2016
        %v2038 = vunpack.c.l.b16 %v2019
        %v2039 = vunpack.c.l.b16 %v2022
        %v2040 = vrot.slane %v2025, 7
        %vm2041 = vcmask 1041409
        %v2042 = vsel %vm2041, %v2040, %v2024
        %v2043 = vrot.slane %v2026, 6
        %vm2044 = vcmask 1042434
        %v2045 = vsel %vm2044, %v2043, %v2042
        %v2046 = vrot.slane %v2027, 5
        %vm2047 = vcmask 1043459
        %v2048 = vsel %vm2047, %v2046, %v2045
        %v2049 = vrot.slane %v2029, 7
        %v2050 = vsel %vm2041, %v2049, %v2028
        %v2051 = vrot.slane %v2030, 6
        %v2052 = vsel %vm2044, %v2051, %v2050
        %v2053 = vrot.slane %v2031, 5
        %v2054 = vsel %vm2047, %v2053, %v2052
        %v2055 = vrot.slane %v2033, 7
        %v2056 = vsel %vm2041, %v2055, %v2032
        %v2057 = vrot.slane %v2034, 6
        %v2058 = vsel %vm2044, %v2057, %v2056
        %v2059 = vrot.slane %v2035, 5
        %v2060 = vsel %vm2047, %v2059, %v2058
        %v2061 = vrot.slane %v2037, 7
        %v2062 = vsel %vm2041, %v2061, %v2036
        %v2063 = vrot.slane %v2038, 6
        %v2064 = vsel %vm2044, %v2063, %v2062
        %v2065 = vrot.slane %v2039, 5
        %v2066 = vsel %vm2047, %v2065, %v2064
        %v2067 = vpack.c.b16 %v2048, %v2048
        %v2068 = vpack.c.b16 %v2054, %v2054
        %v2069 = vpack.c.b16 %v2060, %v2060
        %v2070 = vpack.c.b16 %v2066, %v2066
        %v2071 = vrot.slane %v2067, 2
        %v2072 = vrot.slane %v2068, 2
        %v2073 = vrot.slane %v2069, 2
        %v2074 = vrot.slane %v2070, 2
        %v2077 = vsel %vm1924, %v2067, %v2071
        %v2080 = vsel %vm1924, %v2068, %v2072
        %v2083 = vsel %vm1924, %v2069, %v2073
        %v2086 = vsel %vm1924, %v2070, %v2074
        %2091 = vst.msk [vmem:[%s244] sm:$0x3] %vm1763, %v2077
        %2092 = vst.msk [vmem:[%s244 + $0x2] sm:$0x3] %vm1763, %v2080
        %2093 = vst.msk [vmem:[%s244 + $0x4] sm:$0x3] %vm1763, %v2083
        %2094 = vst.msk [vmem:[%s244 + $0x6] sm:$0x3] %vm1763, %v2086
        %s2095 = sand.u32 %s134, 1
        %s2096 = scalar_lea.sflag [#allocation4], %s2095
        %s2097 = sand.u32 %s134, 1
        %s2098 = smul.addr %s2097, 32
        %s2099 = scalar_lea.vmem [#allocation3], %s2098
        %s2100 = sand.u32 %s162, 1
        %s2101 = scalar_lea.sflag [#allocation6], %s2100
        %s2102 = sand.u32 %s162, 1
        %s2103 = smul.addr %s2102, 8
        %s2104 = scalar_lea.vmem [#allocation5], %s2103
        // Predicated region
        $region45: #{tpu_custom_call.1} parent=35 // pred_check
          %p2105 = pneg %p144
        $region46: #{tpu_custom_call.1} parent=35 // pred_check_branch
          %2107 = sbr.rel (%p2105) target = $region48
        $region47: #{tpu_custom_call.1} parent=35 // pred_region
          %s2108 = smul.u32 8, %s28
          %2110 = vsyncadd %s2096, 0
          %s2111 = smul.addr %s27, 8
          %s2112 = sadd.s32 %s2108, %s2111
          %s2113 = smul.addr %s2112, 4
          %s2114 = scalar_lea.hbm %s4, %s2113
          %s2115 = sshll.u32 %s2099, 4
          %s2116 = int_to_ptr.vmem [resolvable:$true] %s2115
          %s2117 = sshll.u32 %s2114, 4
          %s2118 = int_to_ptr.hbm [resolvable:$true] %s2117
          %2123 = dma.vmem_to_hbm [thread:$0]  %s2116, 512, %s2118, %s2096, 64, 64, 4
        $region48: #{tpu_custom_call.1} parent=35 // pred_fallthru
          _
        // Predicated region
        $region49: #{tpu_custom_call.1} parent=35 // pred_check
          %p2124 = pneg %p172
        $region50: #{tpu_custom_call.1} parent=35 // pred_check_branch
          %2126 = sbr.rel (%p2124) target = $region52
        $region51: #{tpu_custom_call.1} parent=35 // pred_region
          %s2127 = smul.u32 4, %s28
          %2129 = vsyncadd %s2101, 0
          %s2130 = smul.addr %s27, 4
          %s2131 = sadd.s32 %s2127, %s2130
          %s2132 = smul.addr %s2131, 2
          %s2133 = scalar_lea.hbm %s5, %s2132
          %s2134 = sshll.u32 %s2104, 4
          %s2135 = int_to_ptr.vmem [resolvable:$true] %s2134
          %s2136 = sshll.u32 %s2133, 4
          %s2137 = int_to_ptr.hbm [resolvable:$true] %s2136
          %2142 = dma.vmem_to_hbm [thread:$0]  %s2135, 128, %s2137, %s2101, 32, 32, 2
        $region52: #{tpu_custom_call.1} parent=35 // pred_fallthru
          _
      $region36: #{tpu_custom_call.1} parent=5 // pred_fallthru
        _
      %p2143 = scmp.le.s32.totalorder 2, %s18
      // Predicated region
      $region53: #{tpu_custom_call.1} parent=5 // pred_check
        %p2144 = pneg %p2143
      $region54: #{tpu_custom_call.1} parent=5 // pred_check_branch
        %2146 = sbr.rel (%p2144) target = $region56
      $region55: #{tpu_custom_call.1} parent=5 // pred_region
        %s2147 = ssub.s32 %s18, 2
        // Predicated region
        $region57: #{tpu_custom_call.1} parent=55 // pred_check
          %p2148 = pneg %p150
        $region58: #{tpu_custom_call.1} parent=55 // pred_check_branch
          %2150 = sbr.rel (%p2148) target = $region60
        $region59: #{tpu_custom_call.1} parent=55 // pred_region
          %s2151 = sand.u32 %s135, 1
          %s2152 = scalar_lea.sflag [#allocation4], %s2151
          %s2153 = sand.u32 %s135, 1
          %s2154 = smul.addr %s2153, 32
          %s2155 = scalar_lea.vmem [#allocation3], %s2154
          %2157 = dma.done %s2152, 512
        $region60: #{tpu_custom_call.1} parent=55 // pred_fallthru
          _
        // Predicated region
        $region61: #{tpu_custom_call.1} parent=55 // pred_check
          %p2158 = pneg %p178
        $region62: #{tpu_custom_call.1} parent=55 // pred_check_branch
          %2160 = sbr.rel (%p2158) target = $region64
        $region63: #{tpu_custom_call.1} parent=55 // pred_region
          %s2161 = sand.u32 %s163, 1
          %s2162 = scalar_lea.sflag [#allocation6], %s2161
          %s2163 = sand.u32 %s163, 1
          %s2164 = smul.addr %s2163, 8
          %s2165 = scalar_lea.vmem [#allocation5], %s2164
          %2167 = dma.done %s2162, 128
        $region64: #{tpu_custom_call.1} parent=55 // pred_fallthru
          _
      $region56: #{tpu_custom_call.1} parent=5 // pred_fallthru
        _
    $region6: #{tpu_custom_call.1} parent=1 // loop_footer
      %s22 = sadd.s32 1, %s18
    $region7: #{tpu_custom_call.1} parent=1 // loop_footer_branch
      %17 = sbr.rel target = $region3
    $region8: #{tpu_custom_call.1} parent=1 // loop_exit
      _
    %2168 = vsyncpa [#allocation4], 1
    %s2169 = scalar_lea.sflag [#allocation4], 1
    %2170 = vsyncpa %s2169, 1
    %2171 = vsyncpa [#allocation6], 1
    %s2172 = scalar_lea.sflag [#allocation6], 1
    %2173 = vsyncpa %s2172, 1

</llo_original>
